<compile_context>
chip_gen: v6e
topology: v6e:2x2x1
jax: 0.10.0
libtpu: 0.0.40
codegen_flags: <defaults>
</compile_context>

<pallas_src>
import functools

import jax
import jax.numpy as jnp
from jax import lax
from jax.experimental import pallas as pl
from jax.experimental.pallas import tpu as pltpu

LANE = 128        # pad every feature dim to the 128-lane width
EPS = 1e-5        # PyTorch BatchNorm default


# ------------------------------ kernel body ---------------------------------

def _bn_rows(x, gamma, beta, *, relu):
    """BatchNorm over rows (axis 0) with batch statistics, two-pass centered
    variance in f32, optional affine + ReLU.  rsqrt lowers to the EUP."""
    mean = jnp.mean(x, axis=0, keepdims=True)
    xc = x - mean
    var = jnp.mean(xc * xc, axis=0, keepdims=True)      # biased variance
    y = xc * lax.rsqrt(var + EPS)
    if gamma is not None:
        y = y * gamma + beta
    if relu:
        y = jnp.maximum(y, 0.0)
    return y


def _simsiam_kernel(patches_ref,                        # (1, B*Ho*Wo, Kp) bf16
                    conv_w_ref, conv_g_ref, conv_b_ref,
                    fc0_w_ref, fc0_g_ref, fc0_b_ref,
                    fc1_w_ref, fc1_g_ref, fc1_b_ref,
                    fc2_w_ref,
                    pr0_w_ref, pr0_g_ref, pr0_b_ref,
                    pr1_w_ref, pr1_bias_ref,
                    z_ref, p_ref,                        # (1, B, Dp) each
                    *, batch, hw):
    def mm(x, w_ref):
        # bf16 operands on the MXU, f32 accumulation.  Patches arrive bf16
        # already; activations produced in f32 are cast here.
        xb = x if x.dtype == jnp.bfloat16 else x.astype(jnp.bfloat16)
        return jnp.dot(xb, w_ref[...], preferred_element_type=jnp.float32)

    # ---- backbone stem: conv(3x3, s2) as GEMM + BN2d + ReLU + global pool ----
    h = mm(patches_ref[0], conv_w_ref)                          # (B*hw, Cp) f32
    h = _bn_rows(h, conv_g_ref[...], conv_b_ref[...], relu=True)
    # global average pooling: one fused reduction, O(1) in batch.
    feats = jnp.mean(h.reshape(batch, hw, h.shape[-1]), axis=1)  # (B, Cp) f32

    # ---- projection MLP (encoder_q.fc) ----
    h = _bn_rows(mm(feats, fc0_w_ref), fc0_g_ref[...], fc0_b_ref[...], relu=True)
    h = _bn_rows(mm(h, fc1_w_ref), fc1_g_ref[...], fc1_b_ref[...], relu=True)
    # fc[6].bias is a forward no-op (BN(affine=False) follows and removes any
    # per-column constant), so it is intentionally not added here.
    z = _bn_rows(mm(h, fc2_w_ref), None, None, relu=False)       # BN(dim, affine=False)
    z_ref[0] = z.astype(z_ref.dtype)

    # ---- predictor ----
    h = _bn_rows(mm(z, pr0_w_ref), pr0_g_ref[...], pr0_b_ref[...], relu=True)
    p = mm(h, pr1_w_ref) + pr1_bias_ref[...]
    p_ref[0] = p.astype(p_ref.dtype)


# ------------------------------ host wrappers --------------------------------

def _im2col_stride2(x_views_nchw, *, k_pad):
    """3x3 / stride-2 / pad-1 patch extraction for a stack of views.
    (Tiny XLA glue; everything downstream is inside the fused Pallas kernel.)
    Returns bf16 patches so the dominant streamed input is half-width.
    x: (V, B, Cin, H, W) -> (patches (V, B*Ho*Wo, k_pad) bf16, Ho*Wo)."""
    V, B, C, H, W = x_views_nchw.shape
    Ho = (H + 2 - 3) // 2 + 1
    Wo = (W + 2 - 3) // 2 + 1
    x = jnp.transpose(x_views_nchw, (0, 1, 3, 4, 2)).astype(jnp.float32)  # VBHWC
    xp = jnp.pad(x, ((0, 0), (0, 0), (1, 1), (1, 1), (0, 0)))
    cols = []
    for dh in range(3):
        for dw in range(3):
            cols.append(xp[:, :, dh:dh + 2 * Ho - 1:2, dw:dw + 2 * Wo - 1:2, :])
    patches = jnp.concatenate(cols, axis=-1).reshape(V, B * Ho * Wo, 9 * C)
    patches = jnp.pad(patches, ((0, 0), (0, 0), (0, k_pad - 9 * C)))
    return patches.astype(jnp.bfloat16), Ho * Wo


def simsiam_forward(params, x1, x2, *, dim):
    batch = x1.shape[0]
    x = jnp.stack([x1, x2], axis=0)                       # (2, B, Cin, H, W)
    patches, hw = _im2col_stride2(x, k_pad=LANE)          # (2, B*hw, 128) bf16
    n_views, rows, kp = patches.shape
    d_pad = params["fc2_w"].shape[1]

    weight_args = (
        params["conv_w"], params["conv_g"], params["conv_b"],
        params["fc0_w"], params["fc0_g"], params["fc0_b"],
        params["fc1_w"], params["fc1_g"], params["fc1_b"],
        params["fc2_w"],
        params["pred0_w"], params["pred0_g"], params["pred0_b"],
        params["pred1_w"], params["pred1_bias"],
    )

    def full_spec(a):
        return pl.BlockSpec(a.shape, lambda v: (0, 0))

    view_in_spec = pl.BlockSpec((1, rows, kp), lambda v: (v, 0, 0))
    view_out_spec = pl.BlockSpec((1, batch, d_pad), lambda v: (v, 0, 0))

    kernel = functools.partial(_simsiam_kernel, batch=batch, hw=hw)
    z, p = pl.pallas_call(
        kernel,
        out_shape=(jax.ShapeDtypeStruct((n_views, batch, d_pad), jnp.float32),
                   jax.ShapeDtypeStruct((n_views, batch, d_pad), jnp.float32)),
        grid=(n_views,),
        in_specs=[view_in_spec] + [full_spec(a) for a in weight_args],
        out_specs=(view_out_spec, view_out_spec),
        compiler_params=pltpu.CompilerParams(
            dimension_semantics=("parallel",)),
    )(patches, *weight_args)

    z1, z2 = z[0, :, :dim], z[1, :, :dim]
    p1, p2 = p[0, :, :dim], p[1, :, :dim]
    # .detach() -> stop_gradient
    return [p1, p2], [lax.stop_gradient(z1), lax.stop_gradient(z2)]


# ------------------------------ params init ----------------------------------

def _pad2(x, rows, cols):
    return jnp.pad(x, ((0, rows - x.shape[0]), (0, cols - x.shape[1])))


def init_params(key, *, cin=3, prev_dim=32, dim=64, hidden_dim=32, pad=LANE):
    """All matmul weights stored bf16, zero-padded to (pad, pad); BN affine
    params / biases stored f32, zero-padded to (1, pad).  Zero padding keeps
    padded lanes exactly zero through every layer."""
    fc_dim = max(prev_dim, dim)
    ks = jax.random.split(key, 8)

    def dense(k, fan_in, din, dout):
        w = jax.random.normal(k, (din, dout), jnp.float32) / jnp.sqrt(float(fan_in))
        return _pad2(w, pad, pad).astype(jnp.bfloat16)

    def gamma(d):
        return _pad2(jnp.ones((1, d), jnp.float32), 1, pad)

    def beta():
        return jnp.zeros((1, pad), jnp.float32)

    # conv weight (Cout, Cin, 3, 3) -> (kh, kw, Cin, Cout) -> (9*Cin, Cout), padded
    k_conv = 9 * cin
    conv_w = jax.random.normal(ks[0], (prev_dim, cin, 3, 3), jnp.float32) \
        / jnp.sqrt(float(k_conv))
    conv_w = jnp.transpose(conv_w, (2, 3, 1, 0)).reshape(k_conv, prev_dim)
    conv_w = _pad2(conv_w, pad, pad).astype(jnp.bfloat16)

    return {
        # backbone stem
        "conv_w": conv_w, "conv_g": gamma(prev_dim), "conv_b": beta(),
        # projection MLP (encoder_q.fc)
        "fc0_w": dense(ks[1], prev_dim, prev_dim, fc_dim),
        "fc0_g": gamma(fc_dim), "fc0_b": beta(),
        "fc1_w": dense(ks[2], fc_dim, fc_dim, fc_dim),
        "fc1_g": gamma(fc_dim), "fc1_b": beta(),
        "fc2_w": dense(ks[3], fc_dim, fc_dim, dim),
        # NOTE: fc[6].bias exists in PyTorch but is a forward no-op (followed by
        # BN(affine=False)); it is not materialized / DMA'd here.
        # predictor
        "pred0_w": dense(ks[4], dim, dim, hidden_dim),
        "pred0_g": gamma(hidden_dim), "pred0_b": beta(),
        "pred1_w": dense(ks[5], hidden_dim, hidden_dim, dim),
        "pred1_bias": _pad2(
            jax.random.normal(ks[6], (1, dim), jnp.float32)
            / jnp.sqrt(float(hidden_dim)), 1, pad),
    }


# ---------------------------------- main -------------------------------------

if __name__ == "__main__":
    key = jax.random.PRNGKey(0)
    kp, kx1, kx2 = jax.random.split(key, 3)

    B, CIN, H, W = 2, 3, 16, 16
    DIM = 64

    params = init_params(kp, cin=CIN, prev_dim=32, dim=DIM, hidden_dim=32)
    x1 = jax.random.normal(kx1, (B, CIN, H, W), jnp.float32)   # NCHW
    x2 = jax.random.normal(kx2, (B, CIN, H, W), jnp.float32)   # NCHW

    fwd = jax.jit(functools.partial(simsiam_forward, dim=DIM))
    (p1, p2), (z1, z2) = fwd(params, x1, x2)
    jax.block_until_ready((p1, p2, z1, z2))

    assert p1.shape == (B, DIM) and p2.shape == (B, DIM)
    assert z1.shape == (B, DIM) and z2.shape == (B, DIM)
    assert bool(jnp.all(jnp.isfinite(p1))) and bool(jnp.all(jnp.isfinite(p2)))
    assert bool(jnp.all(jnp.isfinite(z1))) and bool(jnp.all(jnp.isfinite(z2)))
    print("KERNEL_OK")
</pallas_src>

<mosaic_0001>
module attributes {stable_mosaic.version = 11 : i64} {
  func.func @_simsiam_kernel(%arg0: i32, %arg1: memref<1x128x128xbf16, #tpu.memory_space<vmem>>, %arg2: memref<128x128xbf16, #tpu.memory_space<vmem>>, %arg3: memref<1x128xf32, #tpu.memory_space<vmem>>, %arg4: memref<1x128xf32, #tpu.memory_space<vmem>>, %arg5: memref<128x128xbf16, #tpu.memory_space<vmem>>, %arg6: memref<1x128xf32, #tpu.memory_space<vmem>>, %arg7: memref<1x128xf32, #tpu.memory_space<vmem>>, %arg8: memref<128x128xbf16, #tpu.memory_space<vmem>>, %arg9: memref<1x128xf32, #tpu.memory_space<vmem>>, %arg10: memref<1x128xf32, #tpu.memory_space<vmem>>, %arg11: memref<128x128xbf16, #tpu.memory_space<vmem>>, %arg12: memref<128x128xbf16, #tpu.memory_space<vmem>>, %arg13: memref<1x128xf32, #tpu.memory_space<vmem>>, %arg14: memref<1x128xf32, #tpu.memory_space<vmem>>, %arg15: memref<128x128xbf16, #tpu.memory_space<vmem>>, %arg16: memref<1x128xf32, #tpu.memory_space<vmem>>, %arg17: memref<1x2x128xf32, #tpu.memory_space<vmem>>, %arg18: memref<1x2x128xf32, #tpu.memory_space<vmem>>) attributes {dimension_semantics = [#tpu.dimension_semantics<parallel>], iteration_bounds = array<i64: 2>, scalar_prefetch = 0 : i64, scratch_operands = 0 : i64, tpu.core_type = #tpu.core_type<tc>, window_params = [{transform_indices = @transform_0, window_bounds = array<i64: 1, 128, 128>}, {pipeline_mode = #tpu.pipeline_mode<synchronous>, transform_indices = @transform_1, window_bounds = array<i64: 128, 128>}, {pipeline_mode = #tpu.pipeline_mode<synchronous>, transform_indices = @transform_2, window_bounds = array<i64: 1, 128>}, {pipeline_mode = #tpu.pipeline_mode<synchronous>, transform_indices = @transform_3, window_bounds = array<i64: 1, 128>}, {pipeline_mode = #tpu.pipeline_mode<synchronous>, transform_indices = @transform_4, window_bounds = array<i64: 128, 128>}, {pipeline_mode = #tpu.pipeline_mode<synchronous>, transform_indices = @transform_5, window_bounds = array<i64: 1, 128>}, {pipeline_mode = #tpu.pipeline_mode<synchronous>, transform_indices = @transform_6, window_bounds = array<i64: 1, 128>}, {pipeline_mode = #tpu.pipeline_mode<synchronous>, transform_indices = @transform_7, window_bounds = array<i64: 128, 128>}, {pipeline_mode = #tpu.pipeline_mode<synchronous>, transform_indices = @transform_8, window_bounds = array<i64: 1, 128>}, {pipeline_mode = #tpu.pipeline_mode<synchronous>, transform_indices = @transform_9, window_bounds = array<i64: 1, 128>}, {pipeline_mode = #tpu.pipeline_mode<synchronous>, transform_indices = @transform_10, window_bounds = array<i64: 128, 128>}, {pipeline_mode = #tpu.pipeline_mode<synchronous>, transform_indices = @transform_11, window_bounds = array<i64: 128, 128>}, {pipeline_mode = #tpu.pipeline_mode<synchronous>, transform_indices = @transform_12, window_bounds = array<i64: 1, 128>}, {pipeline_mode = #tpu.pipeline_mode<synchronous>, transform_indices = @transform_13, window_bounds = array<i64: 1, 128>}, {pipeline_mode = #tpu.pipeline_mode<synchronous>, transform_indices = @transform_14, window_bounds = array<i64: 128, 128>}, {pipeline_mode = #tpu.pipeline_mode<synchronous>, transform_indices = @transform_15, window_bounds = array<i64: 1, 128>}, {transform_indices = @transform_16, window_bounds = array<i64: 1, 2, 128>}, {transform_indices = @transform_17, window_bounds = array<i64: 1, 2, 128>}]} {
    %c0 = arith.constant 0 : index
    %c0_0 = arith.constant 0 : index
    %c0_1 = arith.constant 0 : index
    %0 = vector.load %arg1[%c0, %c0_0, %c0_1] : memref<1x128x128xbf16, #tpu.memory_space<vmem>>, vector<1x128x128xbf16>
    %1 = vector.shape_cast %0 : vector<1x128x128xbf16> to vector<128x128xbf16>
    %c0_2 = arith.constant 0 : index
    %c0_3 = arith.constant 0 : index
    %2 = vector.load %arg2[%c0_2, %c0_3] : memref<128x128xbf16, #tpu.memory_space<vmem>>, vector<128x128xbf16>
    %cst = arith.constant dense<0.000000e+00> : vector<128x128xf32>
    %3 = tpu.matmul %1, %2, %cst {dimension_numbers = #tpu.dot_dimension_numbers<[1], [0], [0], [1], [0, 0, 1, 1], [], []>} : vector<128x128xbf16>, vector<128x128xbf16>, vector<128x128xf32> -> vector<128x128xf32>
    %c0_4 = arith.constant 0 : index
    %c0_5 = arith.constant 0 : index
    %4 = vector.load %arg3[%c0_4, %c0_5] : memref<1x128xf32, #tpu.memory_space<vmem>>, vector<1x128xf32>
    %c0_6 = arith.constant 0 : index
    %c0_7 = arith.constant 0 : index
    %5 = vector.load %arg4[%c0_6, %c0_7] : memref<1x128xf32, #tpu.memory_space<vmem>>, vector<1x128xf32>
    %cst_8 = arith.constant dense<0.000000e+00> : vector<128xf32>
    %6 = vector.multi_reduction <add>, %3, %cst_8 [0] : vector<128x128xf32> to vector<128xf32>
    %7 = vector.shape_cast %6 : vector<128xf32> to vector<1x128xf32>
    %cst_9 = arith.constant 1.280000e+02 : f32
    %8 = vector.broadcast %cst_9 : f32 to vector<1x128xf32>
    %9 = arith.divf %7, %8 : vector<1x128xf32>
    %10 = vector.broadcast %9 : vector<1x128xf32> to vector<128x128xf32>
    %11 = arith.subf %3, %10 : vector<128x128xf32>
    %12 = arith.mulf %11, %11 : vector<128x128xf32>
    %cst_10 = arith.constant dense<0.000000e+00> : vector<128xf32>
    %13 = vector.multi_reduction <add>, %12, %cst_10 [0] : vector<128x128xf32> to vector<128xf32>
    %14 = vector.shape_cast %13 : vector<128xf32> to vector<1x128xf32>
    %cst_11 = arith.constant 1.280000e+02 : f32
    %15 = vector.broadcast %cst_11 : f32 to vector<1x128xf32>
    %16 = arith.divf %14, %15 : vector<1x128xf32>
    %cst_12 = arith.constant 9.99999974E-6 : f32
    %17 = vector.broadcast %cst_12 : f32 to vector<1x128xf32>
    %18 = arith.addf %16, %17 : vector<1x128xf32>
    %19 = math.rsqrt %18 : vector<1x128xf32>
    %20 = vector.broadcast %19 : vector<1x128xf32> to vector<128x128xf32>
    %21 = arith.mulf %11, %20 : vector<128x128xf32>
    %22 = vector.broadcast %4 : vector<1x128xf32> to vector<128x128xf32>
    %23 = arith.mulf %21, %22 : vector<128x128xf32>
    %24 = vector.broadcast %5 : vector<1x128xf32> to vector<128x128xf32>
    %25 = arith.addf %23, %24 : vector<128x128xf32>
    %cst_13 = arith.constant 0.000000e+00 : f32
    %26 = vector.broadcast %cst_13 : f32 to vector<128x128xf32>
    %27 = arith.maximumf %25, %26 : vector<128x128xf32>
    %28 = vector.shape_cast %27 : vector<128x128xf32> to vector<2x64x128xf32>
    %cst_14 = arith.constant dense<0.000000e+00> : vector<2x128xf32>
    %29 = vector.multi_reduction <add>, %28, %cst_14 [1] : vector<2x64x128xf32> to vector<2x128xf32>
    %cst_15 = arith.constant 6.400000e+01 : f32
    %30 = vector.broadcast %cst_15 : f32 to vector<2x128xf32>
    %31 = arith.divf %29, %30 : vector<2x128xf32>
    %32 = arith.truncf %31 : vector<2x128xf32> to vector<2x128xbf16>
    %c0_16 = arith.constant 0 : index
    %c0_17 = arith.constant 0 : index
    %33 = vector.load %arg5[%c0_16, %c0_17] : memref<128x128xbf16, #tpu.memory_space<vmem>>, vector<128x128xbf16>
    %cst_18 = arith.constant dense<0.000000e+00> : vector<2x128xf32>
    %34 = tpu.matmul %32, %33, %cst_18 {dimension_numbers = #tpu.dot_dimension_numbers<[1], [0], [0], [1], [0, 0, 1, 1], [], []>} : vector<2x128xbf16>, vector<128x128xbf16>, vector<2x128xf32> -> vector<2x128xf32>
    %c0_19 = arith.constant 0 : index
    %c0_20 = arith.constant 0 : index
    %35 = vector.load %arg6[%c0_19, %c0_20] : memref<1x128xf32, #tpu.memory_space<vmem>>, vector<1x128xf32>
    %c0_21 = arith.constant 0 : index
    %c0_22 = arith.constant 0 : index
    %36 = vector.load %arg7[%c0_21, %c0_22] : memref<1x128xf32, #tpu.memory_space<vmem>>, vector<1x128xf32>
    %cst_23 = arith.constant dense<0.000000e+00> : vector<128xf32>
    %37 = vector.multi_reduction <add>, %34, %cst_23 [0] : vector<2x128xf32> to vector<128xf32>
    %38 = vector.shape_cast %37 : vector<128xf32> to vector<1x128xf32>
    %cst_24 = arith.constant 2.000000e+00 : f32
    %39 = vector.broadcast %cst_24 : f32 to vector<1x128xf32>
    %40 = arith.divf %38, %39 : vector<1x128xf32>
    %41 = vector.broadcast %40 : vector<1x128xf32> to vector<2x128xf32>
    %42 = arith.subf %34, %41 : vector<2x128xf32>
    %43 = arith.mulf %42, %42 : vector<2x128xf32>
    %cst_25 = arith.constant dense<0.000000e+00> : vector<128xf32>
    %44 = vector.multi_reduction <add>, %43, %cst_25 [0] : vector<2x128xf32> to vector<128xf32>
    %45 = vector.shape_cast %44 : vector<128xf32> to vector<1x128xf32>
    %cst_26 = arith.constant 2.000000e+00 : f32
    %46 = vector.broadcast %cst_26 : f32 to vector<1x128xf32>
    %47 = arith.divf %45, %46 : vector<1x128xf32>
    %cst_27 = arith.constant 9.99999974E-6 : f32
    %48 = vector.broadcast %cst_27 : f32 to vector<1x128xf32>
    %49 = arith.addf %47, %48 : vector<1x128xf32>
    %50 = math.rsqrt %49 : vector<1x128xf32>
    %51 = vector.broadcast %50 : vector<1x128xf32> to vector<2x128xf32>
    %52 = arith.mulf %42, %51 : vector<2x128xf32>
    %53 = vector.broadcast %35 : vector<1x128xf32> to vector<2x128xf32>
    %54 = arith.mulf %52, %53 : vector<2x128xf32>
    %55 = vector.broadcast %36 : vector<1x128xf32> to vector<2x128xf32>
    %56 = arith.addf %54, %55 : vector<2x128xf32>
    %cst_28 = arith.constant 0.000000e+00 : f32
    %57 = vector.broadcast %cst_28 : f32 to vector<2x128xf32>
    %58 = arith.maximumf %56, %57 : vector<2x128xf32>
    %59 = arith.truncf %58 : vector<2x128xf32> to vector<2x128xbf16>
    %c0_29 = arith.constant 0 : index
    %c0_30 = arith.constant 0 : index
    %60 = vector.load %arg8[%c0_29, %c0_30] : memref<128x128xbf16, #tpu.memory_space<vmem>>, vector<128x128xbf16>
    %cst_31 = arith.constant dense<0.000000e+00> : vector<2x128xf32>
    %61 = tpu.matmul %59, %60, %cst_31 {dimension_numbers = #tpu.dot_dimension_numbers<[1], [0], [0], [1], [0, 0, 1, 1], [], []>} : vector<2x128xbf16>, vector<128x128xbf16>, vector<2x128xf32> -> vector<2x128xf32>
    %c0_32 = arith.constant 0 : index
    %c0_33 = arith.constant 0 : index
    %62 = vector.load %arg9[%c0_32, %c0_33] : memref<1x128xf32, #tpu.memory_space<vmem>>, vector<1x128xf32>
    %c0_34 = arith.constant 0 : index
    %c0_35 = arith.constant 0 : index
    %63 = vector.load %arg10[%c0_34, %c0_35] : memref<1x128xf32, #tpu.memory_space<vmem>>, vector<1x128xf32>
    %cst_36 = arith.constant dense<0.000000e+00> : vector<128xf32>
    %64 = vector.multi_reduction <add>, %61, %cst_36 [0] : vector<2x128xf32> to vector<128xf32>
    %65 = vector.shape_cast %64 : vector<128xf32> to vector<1x128xf32>
    %cst_37 = arith.constant 2.000000e+00 : f32
    %66 = vector.broadcast %cst_37 : f32 to vector<1x128xf32>
    %67 = arith.divf %65, %66 : vector<1x128xf32>
    %68 = vector.broadcast %67 : vector<1x128xf32> to vector<2x128xf32>
    %69 = arith.subf %61, %68 : vector<2x128xf32>
    %70 = arith.mulf %69, %69 : vector<2x128xf32>
    %cst_38 = arith.constant dense<0.000000e+00> : vector<128xf32>
    %71 = vector.multi_reduction <add>, %70, %cst_38 [0] : vector<2x128xf32> to vector<128xf32>
    %72 = vector.shape_cast %71 : vector<128xf32> to vector<1x128xf32>
    %cst_39 = arith.constant 2.000000e+00 : f32
    %73 = vector.broadcast %cst_39 : f32 to vector<1x128xf32>
    %74 = arith.divf %72, %73 : vector<1x128xf32>
    %cst_40 = arith.constant 9.99999974E-6 : f32
    %75 = vector.broadcast %cst_40 : f32 to vector<1x128xf32>
    %76 = arith.addf %74, %75 : vector<1x128xf32>
    %77 = math.rsqrt %76 : vector<1x128xf32>
    %78 = vector.broadcast %77 : vector<1x128xf32> to vector<2x128xf32>
    %79 = arith.mulf %69, %78 : vector<2x128xf32>
    %80 = vector.broadcast %62 : vector<1x128xf32> to vector<2x128xf32>
    %81 = arith.mulf %79, %80 : vector<2x128xf32>
    %82 = vector.broadcast %63 : vector<1x128xf32> to vector<2x128xf32>
    %83 = arith.addf %81, %82 : vector<2x128xf32>
    %cst_41 = arith.constant 0.000000e+00 : f32
    %84 = vector.broadcast %cst_41 : f32 to vector<2x128xf32>
    %85 = arith.maximumf %83, %84 : vector<2x128xf32>
    %86 = arith.truncf %85 : vector<2x128xf32> to vector<2x128xbf16>
    %c0_42 = arith.constant 0 : index
    %c0_43 = arith.constant 0 : index
    %87 = vector.load %arg11[%c0_42, %c0_43] : memref<128x128xbf16, #tpu.memory_space<vmem>>, vector<128x128xbf16>
    %cst_44 = arith.constant dense<0.000000e+00> : vector<2x128xf32>
    %88 = tpu.matmul %86, %87, %cst_44 {dimension_numbers = #tpu.dot_dimension_numbers<[1], [0], [0], [1], [0, 0, 1, 1], [], []>} : vector<2x128xbf16>, vector<128x128xbf16>, vector<2x128xf32> -> vector<2x128xf32>
    %cst_45 = arith.constant dense<0.000000e+00> : vector<128xf32>
    %89 = vector.multi_reduction <add>, %88, %cst_45 [0] : vector<2x128xf32> to vector<128xf32>
    %90 = vector.shape_cast %89 : vector<128xf32> to vector<1x128xf32>
    %cst_46 = arith.constant 2.000000e+00 : f32
    %91 = vector.broadcast %cst_46 : f32 to vector<1x128xf32>
    %92 = arith.divf %90, %91 : vector<1x128xf32>
    %93 = vector.broadcast %92 : vector<1x128xf32> to vector<2x128xf32>
    %94 = arith.subf %88, %93 : vector<2x128xf32>
    %95 = arith.mulf %94, %94 : vector<2x128xf32>
    %cst_47 = arith.constant dense<0.000000e+00> : vector<128xf32>
    %96 = vector.multi_reduction <add>, %95, %cst_47 [0] : vector<2x128xf32> to vector<128xf32>
    %97 = vector.shape_cast %96 : vector<128xf32> to vector<1x128xf32>
    %cst_48 = arith.constant 2.000000e+00 : f32
    %98 = vector.broadcast %cst_48 : f32 to vector<1x128xf32>
    %99 = arith.divf %97, %98 : vector<1x128xf32>
    %cst_49 = arith.constant 9.99999974E-6 : f32
    %100 = vector.broadcast %cst_49 : f32 to vector<1x128xf32>
    %101 = arith.addf %99, %100 : vector<1x128xf32>
    %102 = math.rsqrt %101 : vector<1x128xf32>
    %103 = vector.broadcast %102 : vector<1x128xf32> to vector<2x128xf32>
    %104 = arith.mulf %94, %103 : vector<2x128xf32>
    %c0_50 = arith.constant 0 : index
    %c0_51 = arith.constant 0 : index
    %c0_52 = arith.constant 0 : index
    %105 = vector.load %arg17[%c0_50, %c0_51, %c0_52] : memref<1x2x128xf32, #tpu.memory_space<vmem>>, vector<1x2x128xf32>
    %106 = vector.shape_cast %105 : vector<1x2x128xf32> to vector<2x128xf32>
    %107 = vector.shape_cast %104 : vector<2x128xf32> to vector<1x2x128xf32>
    tpu.vector_store %arg17[%c0_50, %c0_51, %c0_52], %107 {strides = array<i32>} : memref<1x2x128xf32, #tpu.memory_space<vmem>>, vector<1x2x128xf32>,
    %108 = arith.truncf %104 : vector<2x128xf32> to vector<2x128xbf16>
    %c0_53 = arith.constant 0 : index
    %c0_54 = arith.constant 0 : index
    %109 = vector.load %arg12[%c0_53, %c0_54] : memref<128x128xbf16, #tpu.memory_space<vmem>>, vector<128x128xbf16>
    %cst_55 = arith.constant dense<0.000000e+00> : vector<2x128xf32>
    %110 = tpu.matmul %108, %109, %cst_55 {dimension_numbers = #tpu.dot_dimension_numbers<[1], [0], [0], [1], [0, 0, 1, 1], [], []>} : vector<2x128xbf16>, vector<128x128xbf16>, vector<2x128xf32> -> vector<2x128xf32>
    %c0_56 = arith.constant 0 : index
    %c0_57 = arith.constant 0 : index
    %111 = vector.load %arg13[%c0_56, %c0_57] : memref<1x128xf32, #tpu.memory_space<vmem>>, vector<1x128xf32>
    %c0_58 = arith.constant 0 : index
    %c0_59 = arith.constant 0 : index
    %112 = vector.load %arg14[%c0_58, %c0_59] : memref<1x128xf32, #tpu.memory_space<vmem>>, vector<1x128xf32>
    %cst_60 = arith.constant dense<0.000000e+00> : vector<128xf32>
    %113 = vector.multi_reduction <add>, %110, %cst_60 [0] : vector<2x128xf32> to vector<128xf32>
    %114 = vector.shape_cast %113 : vector<128xf32> to vector<1x128xf32>
    %cst_61 = arith.constant 2.000000e+00 : f32
    %115 = vector.broadcast %cst_61 : f32 to vector<1x128xf32>
    %116 = arith.divf %114, %115 : vector<1x128xf32>
    %117 = vector.broadcast %116 : vector<1x128xf32> to vector<2x128xf32>
    %118 = arith.subf %110, %117 : vector<2x128xf32>
    %119 = arith.mulf %118, %118 : vector<2x128xf32>
    %cst_62 = arith.constant dense<0.000000e+00> : vector<128xf32>
    %120 = vector.multi_reduction <add>, %119, %cst_62 [0] : vector<2x128xf32> to vector<128xf32>
    %121 = vector.shape_cast %120 : vector<128xf32> to vector<1x128xf32>
    %cst_63 = arith.constant 2.000000e+00 : f32
    %122 = vector.broadcast %cst_63 : f32 to vector<1x128xf32>
    %123 = arith.divf %121, %122 : vector<1x128xf32>
    %cst_64 = arith.constant 9.99999974E-6 : f32
    %124 = vector.broadcast %cst_64 : f32 to vector<1x128xf32>
    %125 = arith.addf %123, %124 : vector<1x128xf32>
    %126 = math.rsqrt %125 : vector<1x128xf32>
    %127 = vector.broadcast %126 : vector<1x128xf32> to vector<2x128xf32>
    %128 = arith.mulf %118, %127 : vector<2x128xf32>
    %129 = vector.broadcast %111 : vector<1x128xf32> to vector<2x128xf32>
    %130 = arith.mulf %128, %129 : vector<2x128xf32>
    %131 = vector.broadcast %112 : vector<1x128xf32> to vector<2x128xf32>
    %132 = arith.addf %130, %131 : vector<2x128xf32>
    %cst_65 = arith.constant 0.000000e+00 : f32
    %133 = vector.broadcast %cst_65 : f32 to vector<2x128xf32>
    %134 = arith.maximumf %132, %133 : vector<2x128xf32>
    %135 = arith.truncf %134 : vector<2x128xf32> to vector<2x128xbf16>
    %c0_66 = arith.constant 0 : index
    %c0_67 = arith.constant 0 : index
    %136 = vector.load %arg15[%c0_66, %c0_67] : memref<128x128xbf16, #tpu.memory_space<vmem>>, vector<128x128xbf16>
    %cst_68 = arith.constant dense<0.000000e+00> : vector<2x128xf32>
    %137 = tpu.matmul %135, %136, %cst_68 {dimension_numbers = #tpu.dot_dimension_numbers<[1], [0], [0], [1], [0, 0, 1, 1], [], []>} : vector<2x128xbf16>, vector<128x128xbf16>, vector<2x128xf32> -> vector<2x128xf32>
    %c0_69 = arith.constant 0 : index
    %c0_70 = arith.constant 0 : index
    %138 = vector.load %arg16[%c0_69, %c0_70] : memref<1x128xf32, #tpu.memory_space<vmem>>, vector<1x128xf32>
    %139 = vector.broadcast %138 : vector<1x128xf32> to vector<2x128xf32>
    %140 = arith.addf %137, %139 : vector<2x128xf32>
    %c0_71 = arith.constant 0 : index
    %c0_72 = arith.constant 0 : index
    %c0_73 = arith.constant 0 : index
    %141 = vector.load %arg18[%c0_71, %c0_72, %c0_73] : memref<1x2x128xf32, #tpu.memory_space<vmem>>, vector<1x2x128xf32>
    %142 = vector.shape_cast %141 : vector<1x2x128xf32> to vector<2x128xf32>
    %143 = vector.shape_cast %140 : vector<2x128xf32> to vector<1x2x128xf32>
    tpu.vector_store %arg18[%c0_71, %c0_72, %c0_73], %143 {strides = array<i32>} : memref<1x2x128xf32, #tpu.memory_space<vmem>>, vector<1x2x128xf32>,
    return
  }
  func.func @transform_0(%arg0: i32) -> (i32, i32, i32) {
    %c0_i32 = arith.constant 0 : i32
    %c0_i32_0 = arith.constant 0 : i32
    %c0_i32_1 = arith.constant 0 : i32
    return %arg0, %c0_i32, %c0_i32_0 : i32, i32, i32
  }
  func.func @transform_1(%arg0: i32) -> (i32, i32) {
    %c0_i32 = arith.constant 0 : i32
    %c0_i32_0 = arith.constant 0 : i32
    %c0_i32_1 = arith.constant 0 : i32
    return %c0_i32, %c0_i32_0 : i32, i32
  }
  func.func @transform_2(%arg0: i32) -> (i32, i32) {
    %c0_i32 = arith.constant 0 : i32
    %c0_i32_0 = arith.constant 0 : i32
    %c0_i32_1 = arith.constant 0 : i32
    return %c0_i32, %c0_i32_0 : i32, i32
  }
  func.func @transform_3(%arg0: i32) -> (i32, i32) {
    %c0_i32 = arith.constant 0 : i32
    %c0_i32_0 = arith.constant 0 : i32
    %c0_i32_1 = arith.constant 0 : i32
    return %c0_i32, %c0_i32_0 : i32, i32
  }
  func.func @transform_4(%arg0: i32) -> (i32, i32) {
    %c0_i32 = arith.constant 0 : i32
    %c0_i32_0 = arith.constant 0 : i32
    %c0_i32_1 = arith.constant 0 : i32
    return %c0_i32, %c0_i32_0 : i32, i32
  }
  func.func @transform_5(%arg0: i32) -> (i32, i32) {
    %c0_i32 = arith.constant 0 : i32
    %c0_i32_0 = arith.constant 0 : i32
    %c0_i32_1 = arith.constant 0 : i32
    return %c0_i32, %c0_i32_0 : i32, i32
  }
  func.func @transform_6(%arg0: i32) -> (i32, i32) {
    %c0_i32 = arith.constant 0 : i32
    %c0_i32_0 = arith.constant 0 : i32
    %c0_i32_1 = arith.constant 0 : i32
    return %c0_i32, %c0_i32_0 : i32, i32
  }
  func.func @transform_7(%arg0: i32) -> (i32, i32) {
    %c0_i32 = arith.constant 0 : i32
    %c0_i32_0 = arith.constant 0 : i32
    %c0_i32_1 = arith.constant 0 : i32
    return %c0_i32, %c0_i32_0 : i32, i32
  }
  func.func @transform_8(%arg0: i32) -> (i32, i32) {
    %c0_i32 = arith.constant 0 : i32
    %c0_i32_0 = arith.constant 0 : i32
    %c0_i32_1 = arith.constant 0 : i32
    return %c0_i32, %c0_i32_0 : i32, i32
  }
  func.func @transform_9(%arg0: i32) -> (i32, i32) {
    %c0_i32 = arith.constant 0 : i32
    %c0_i32_0 = arith.constant 0 : i32
    %c0_i32_1 = arith.constant 0 : i32
    return %c0_i32, %c0_i32_0 : i32, i32
  }
  func.func @transform_10(%arg0: i32) -> (i32, i32) {
    %c0_i32 = arith.constant 0 : i32
    %c0_i32_0 = arith.constant 0 : i32
    %c0_i32_1 = arith.constant 0 : i32
    return %c0_i32, %c0_i32_0 : i32, i32
  }
  func.func @transform_11(%arg0: i32) -> (i32, i32) {
    %c0_i32 = arith.constant 0 : i32
    %c0_i32_0 = arith.constant 0 : i32
    %c0_i32_1 = arith.constant 0 : i32
    return %c0_i32, %c0_i32_0 : i32, i32
  }
  func.func @transform_12(%arg0: i32) -> (i32, i32) {
    %c0_i32 = arith.constant 0 : i32
    %c0_i32_0 = arith.constant 0 : i32
    %c0_i32_1 = arith.constant 0 : i32
    return %c0_i32, %c0_i32_0 : i32, i32
  }
  func.func @transform_13(%arg0: i32) -> (i32, i32) {
    %c0_i32 = arith.constant 0 : i32
    %c0_i32_0 = arith.constant 0 : i32
    %c0_i32_1 = arith.constant 0 : i32
    return %c0_i32, %c0_i32_0 : i32, i32
  }
  func.func @transform_14(%arg0: i32) -> (i32, i32) {
    %c0_i32 = arith.constant 0 : i32
    %c0_i32_0 = arith.constant 0 : i32
    %c0_i32_1 = arith.constant 0 : i32
    return %c0_i32, %c0_i32_0 : i32, i32
  }
  func.func @transform_15(%arg0: i32) -> (i32, i32) {
    %c0_i32 = arith.constant 0 : i32
    %c0_i32_0 = arith.constant 0 : i32
    %c0_i32_1 = arith.constant 0 : i32
    return %c0_i32, %c0_i32_0 : i32, i32
  }
  func.func @transform_16(%arg0: i32) -> (i32, i32, i32) {
    %c0_i32 = arith.constant 0 : i32
    %c0_i32_0 = arith.constant 0 : i32
    %c0_i32_1 = arith.constant 0 : i32
    return %arg0, %c0_i32, %c0_i32_0 : i32, i32, i32
  }
  func.func @transform_17(%arg0: i32) -> (i32, i32, i32) {
    %c0_i32 = arith.constant 0 : i32
    %c0_i32_0 = arith.constant 0 : i32
    %c0_i32_1 = arith.constant 0 : i32
    return %arg0, %c0_i32, %c0_i32_0 : i32, i32, i32
  }
}

</mosaic_0001>

<llo_original>
// kernel: simsiam_forward.1
$region0: #{simsiam_forward.1}
  #allocation0 [shape = 'u32[]', space=smem, size = 0x4, offset = 0x4, fixed_abs, tag = 'smem constant byte address 0x4 - core index']
  #allocation1 [shape = 'u32[144,128]{1,0:T(1,128)}', space=vmem, size = 0x12000, scoped, tag = 'internal scratch']
  %s0 = inlined_call_operand.vmem [shape: bf16[2,128,128], index: 0, kind: input, shape index: {}]
  %s1 = inlined_call_operand.vmem [shape: bf16[128,128], index: 1, kind: input, shape index: {}]
  %s2 = inlined_call_operand.vmem [shape: f32[1,128], index: 2, kind: input, shape index: {}]
  %s3 = inlined_call_operand.vmem [shape: f32[1,128], index: 3, kind: input, shape index: {}]
  %s4 = inlined_call_operand.vmem [shape: bf16[128,128], index: 4, kind: input, shape index: {}]
  %s5 = inlined_call_operand.vmem [shape: f32[1,128], index: 5, kind: input, shape index: {}]
  %s6 = inlined_call_operand.vmem [shape: f32[1,128], index: 6, kind: input, shape index: {}]
  %s7 = inlined_call_operand.vmem [shape: bf16[128,128], index: 7, kind: input, shape index: {}]
  %s8 = inlined_call_operand.vmem [shape: f32[1,128], index: 8, kind: input, shape index: {}]
  %s9 = inlined_call_operand.vmem [shape: f32[1,128], index: 9, kind: input, shape index: {}]
  %s10 = inlined_call_operand.vmem [shape: bf16[128,128], index: 10, kind: input, shape index: {}]
  %s11 = inlined_call_operand.vmem [shape: bf16[128,128], index: 11, kind: input, shape index: {}]
  %s12 = inlined_call_operand.vmem [shape: f32[1,128], index: 12, kind: input, shape index: {}]
  %s13 = inlined_call_operand.vmem [shape: f32[1,128], index: 13, kind: input, shape index: {}]
  %s14 = inlined_call_operand.vmem [shape: bf16[128,128], index: 14, kind: input, shape index: {}]
  %s15 = inlined_call_operand.vmem [shape: f32[1,128], index: 15, kind: input, shape index: {}]
  %s16 = inlined_call_operand.vmem [shape: f32[2,2,128], index: 16, kind: output, shape index: {0}]
  %s17 = inlined_call_operand.vmem [shape: f32[2,2,128], index: 17, kind: output, shape index: {1}]
  %18 = xla_tuple %s16, %s17
  %s19 = sld [smem:[#allocation0]]
  $region105: #{simsiam_forward.1} parent=0
    _
  %s21 = ssub.s32 1, %s19
  %s22 = scalar_select 0, %s21, %s19
  loop: start=0, step=1, limit=4
  $region2: #{simsiam_forward.1} parent=0 // loop_pre_header
    _
  $region3: #{simsiam_forward.1} parent=0 // loop_header
    %s24 = sphi 0, %s28
    %p25 = scmp.ge.s32.totalorder %s24, 4
    %s34 = sphi 0, %s36
    %s37 = sphi 0, %s34
    %s38 = sphi 0, %s37
    %s54 = sphi 0, %s38
    %s58 = sphi 0, %s58
    %s60 = sphi 0, %s58
    %s61 = sphi 0, %s60
    %s75 = sphi 0, %s61
    %s79 = sphi 0, %s79
    %s81 = sphi 0, %s79
    %s82 = sphi 0, %s81
    %s96 = sphi 0, %s82
    %s100 = sphi 0, %s100
    %s102 = sphi 0, %s100
    %s103 = sphi 0, %s102
    %s117 = sphi 0, %s103
    %s121 = sphi 0, %s121
    %s123 = sphi 0, %s121
    %s124 = sphi 0, %s123
    %s138 = sphi 0, %s124
    %s142 = sphi 0, %s142
    %s144 = sphi 0, %s142
    %s145 = sphi 0, %s144
    %s159 = sphi 0, %s145
    %s163 = sphi 0, %s163
    %s165 = sphi 0, %s163
    %s166 = sphi 0, %s165
    %s180 = sphi 0, %s166
    %s184 = sphi 0, %s184
    %s186 = sphi 0, %s184
    %s187 = sphi 0, %s186
    %s201 = sphi 0, %s187
    %s205 = sphi 0, %s205
    %s207 = sphi 0, %s205
    %s208 = sphi 0, %s207
    %s222 = sphi 0, %s208
    %s226 = sphi 0, %s226
    %s228 = sphi 0, %s226
    %s229 = sphi 0, %s228
    %s243 = sphi 0, %s229
    %s247 = sphi 0, %s247
    %s249 = sphi 0, %s247
    %s250 = sphi 0, %s249
    %s264 = sphi 0, %s250
    %s268 = sphi 0, %s268
    %s270 = sphi 0, %s268
    %s271 = sphi 0, %s270
    %s285 = sphi 0, %s271
    %s289 = sphi 0, %s289
    %s291 = sphi 0, %s289
    %s292 = sphi 0, %s291
    %s306 = sphi 0, %s292
    %s310 = sphi 0, %s310
    %s312 = sphi 0, %s310
    %s313 = sphi 0, %s312
    %s327 = sphi 0, %s313
    %s331 = sphi 0, %s331
    %s333 = sphi 0, %s331
    %s334 = sphi 0, %s333
    %s348 = sphi 0, %s334
    %s352 = sphi 0, %s352
    %s354 = sphi 0, %s352
    %s355 = sphi 0, %s354
    %s369 = sphi 0, %s355
    %s375 = sphi 0, %s377
    %s378 = sphi 0, %s375
    %s379 = sphi 0, %s378
    %s395 = sphi 0, %s379
    %s401 = sphi 0, %s403
    %s404 = sphi 0, %s401
    %s405 = sphi 0, %s404
    %s421 = sphi 0, %s405
  $region4: #{simsiam_forward.1} parent=0 // loop_header_branch
    %27 = sbr.rel (%p25) target = $region8
  $region5: #{simsiam_forward.1} parent=0 // loop_body
    %s29 = ssub.s32 %s24, 1
    %s30 = ssub.s32 %s24, 2
    %s31 = sadd.s32 %s24, 1
    %s32 = ssub.s32 %s24, %s31
    %p33 = scmp.eq.s32.totalorder %s32, 0
    %s35 = sadd.s32 %s34, 1
    %s36 = scalar_select %p33, %s34, %s35
    %p39 = pneg %p33
    %p40 = scmp.eq.s32.totalorder %s24, 1
    %p41 = por %p39, %p40
    %p42 = scmp.ne.s32.totalorder %s34, %s37
    %p43 = scmp.eq.s32.totalorder %s24, 0
    %p44 = por %p42, %p43
    %p45 = scmp.ne.s32.totalorder %s34, %s37
    %p46 = scmp.eq.s32.totalorder %s29, 1
    %p47 = por %p45, %p46
    %p48 = scmp.ne.s32.totalorder %s37, %s38
    %p49 = scmp.eq.s32.totalorder %s29, 0
    %p50 = por %p48, %p49
    %p51 = scmp.ne.s32.totalorder %s37, %s38
    %p52 = scmp.eq.s32.totalorder %s30, 1
    %p53 = por %p51, %p52
    %p55 = scmp.ne.s32.totalorder %s38, %s54
    %p56 = scmp.eq.s32.totalorder %s30, 0
    %p57 = por %p55, %p56
    %s59 = sadd.s32 %s58, 1
    %p62 = scmp.eq.s32.totalorder %s24, 1
    %p63 = scmp.ne.s32.totalorder %s58, %s60
    %p64 = scmp.eq.s32.totalorder %s24, 0
    %p65 = por %p63, %p64
    %p66 = scmp.ne.s32.totalorder %s58, %s60
    %p67 = scmp.eq.s32.totalorder %s29, 1
    %p68 = por %p66, %p67
    %p69 = scmp.ne.s32.totalorder %s60, %s61
    %p70 = scmp.eq.s32.totalorder %s29, 0
    %p71 = por %p69, %p70
    %p72 = scmp.ne.s32.totalorder %s60, %s61
    %p73 = scmp.eq.s32.totalorder %s30, 1
    %p74 = por %p72, %p73
    %p76 = scmp.ne.s32.totalorder %s61, %s75
    %p77 = scmp.eq.s32.totalorder %s30, 0
    %p78 = por %p76, %p77
    %s80 = sadd.s32 %s79, 1
    %p83 = scmp.eq.s32.totalorder %s24, 1
    %p84 = scmp.ne.s32.totalorder %s79, %s81
    %p85 = scmp.eq.s32.totalorder %s24, 0
    %p86 = por %p84, %p85
    %p87 = scmp.ne.s32.totalorder %s79, %s81
    %p88 = scmp.eq.s32.totalorder %s29, 1
    %p89 = por %p87, %p88
    %p90 = scmp.ne.s32.totalorder %s81, %s82
    %p91 = scmp.eq.s32.totalorder %s29, 0
    %p92 = por %p90, %p91
    %p93 = scmp.ne.s32.totalorder %s81, %s82
    %p94 = scmp.eq.s32.totalorder %s30, 1
    %p95 = por %p93, %p94
    %p97 = scmp.ne.s32.totalorder %s82, %s96
    %p98 = scmp.eq.s32.totalorder %s30, 0
    %p99 = por %p97, %p98
    %s101 = sadd.s32 %s100, 1
    %p104 = scmp.eq.s32.totalorder %s24, 1
    %p105 = scmp.ne.s32.totalorder %s100, %s102
    %p106 = scmp.eq.s32.totalorder %s24, 0
    %p107 = por %p105, %p106
    %p108 = scmp.ne.s32.totalorder %s100, %s102
    %p109 = scmp.eq.s32.totalorder %s29, 1
    %p110 = por %p108, %p109
    %p111 = scmp.ne.s32.totalorder %s102, %s103
    %p112 = scmp.eq.s32.totalorder %s29, 0
    %p113 = por %p111, %p112
    %p114 = scmp.ne.s32.totalorder %s102, %s103
    %p115 = scmp.eq.s32.totalorder %s30, 1
    %p116 = por %p114, %p115
    %p118 = scmp.ne.s32.totalorder %s103, %s117
    %p119 = scmp.eq.s32.totalorder %s30, 0
    %p120 = por %p118, %p119
    %s122 = sadd.s32 %s121, 1
    %p125 = scmp.eq.s32.totalorder %s24, 1
    %p126 = scmp.ne.s32.totalorder %s121, %s123
    %p127 = scmp.eq.s32.totalorder %s24, 0
    %p128 = por %p126, %p127
    %p129 = scmp.ne.s32.totalorder %s121, %s123
    %p130 = scmp.eq.s32.totalorder %s29, 1
    %p131 = por %p129, %p130
    %p132 = scmp.ne.s32.totalorder %s123, %s124
    %p133 = scmp.eq.s32.totalorder %s29, 0
    %p134 = por %p132, %p133
    %p135 = scmp.ne.s32.totalorder %s123, %s124
    %p136 = scmp.eq.s32.totalorder %s30, 1
    %p137 = por %p135, %p136
    %p139 = scmp.ne.s32.totalorder %s124, %s138
    %p140 = scmp.eq.s32.totalorder %s30, 0
    %p141 = por %p139, %p140
    %s143 = sadd.s32 %s142, 1
    %p146 = scmp.eq.s32.totalorder %s24, 1
    %p147 = scmp.ne.s32.totalorder %s142, %s144
    %p148 = scmp.eq.s32.totalorder %s24, 0
    %p149 = por %p147, %p148
    %p150 = scmp.ne.s32.totalorder %s142, %s144
    %p151 = scmp.eq.s32.totalorder %s29, 1
    %p152 = por %p150, %p151
    %p153 = scmp.ne.s32.totalorder %s144, %s145
    %p154 = scmp.eq.s32.totalorder %s29, 0
    %p155 = por %p153, %p154
    %p156 = scmp.ne.s32.totalorder %s144, %s145
    %p157 = scmp.eq.s32.totalorder %s30, 1
    %p158 = por %p156, %p157
    %p160 = scmp.ne.s32.totalorder %s145, %s159
    %p161 = scmp.eq.s32.totalorder %s30, 0
    %p162 = por %p160, %p161
    %s164 = sadd.s32 %s163, 1
    %p167 = scmp.eq.s32.totalorder %s24, 1
    %p168 = scmp.ne.s32.totalorder %s163, %s165
    %p169 = scmp.eq.s32.totalorder %s24, 0
    %p170 = por %p168, %p169
    %p171 = scmp.ne.s32.totalorder %s163, %s165
    %p172 = scmp.eq.s32.totalorder %s29, 1
    %p173 = por %p171, %p172
    %p174 = scmp.ne.s32.totalorder %s165, %s166
    %p175 = scmp.eq.s32.totalorder %s29, 0
    %p176 = por %p174, %p175
    %p177 = scmp.ne.s32.totalorder %s165, %s166
    %p178 = scmp.eq.s32.totalorder %s30, 1
    %p179 = por %p177, %p178
    %p181 = scmp.ne.s32.totalorder %s166, %s180
    %p182 = scmp.eq.s32.totalorder %s30, 0
    %p183 = por %p181, %p182
    %s185 = sadd.s32 %s184, 1
    %p188 = scmp.eq.s32.totalorder %s24, 1
    %p189 = scmp.ne.s32.totalorder %s184, %s186
    %p190 = scmp.eq.s32.totalorder %s24, 0
    %p191 = por %p189, %p190
    %p192 = scmp.ne.s32.totalorder %s184, %s186
    %p193 = scmp.eq.s32.totalorder %s29, 1
    %p194 = por %p192, %p193
    %p195 = scmp.ne.s32.totalorder %s186, %s187
    %p196 = scmp.eq.s32.totalorder %s29, 0
    %p197 = por %p195, %p196
    %p198 = scmp.ne.s32.totalorder %s186, %s187
    %p199 = scmp.eq.s32.totalorder %s30, 1
    %p200 = por %p198, %p199
    %p202 = scmp.ne.s32.totalorder %s187, %s201
    %p203 = scmp.eq.s32.totalorder %s30, 0
    %p204 = por %p202, %p203
    %s206 = sadd.s32 %s205, 1
    %p209 = scmp.eq.s32.totalorder %s24, 1
    %p210 = scmp.ne.s32.totalorder %s205, %s207
    %p211 = scmp.eq.s32.totalorder %s24, 0
    %p212 = por %p210, %p211
    %p213 = scmp.ne.s32.totalorder %s205, %s207
    %p214 = scmp.eq.s32.totalorder %s29, 1
    %p215 = por %p213, %p214
    %p216 = scmp.ne.s32.totalorder %s207, %s208
    %p217 = scmp.eq.s32.totalorder %s29, 0
    %p218 = por %p216, %p217
    %p219 = scmp.ne.s32.totalorder %s207, %s208
    %p220 = scmp.eq.s32.totalorder %s30, 1
    %p221 = por %p219, %p220
    %p223 = scmp.ne.s32.totalorder %s208, %s222
    %p224 = scmp.eq.s32.totalorder %s30, 0
    %p225 = por %p223, %p224
    %s227 = sadd.s32 %s226, 1
    %p230 = scmp.eq.s32.totalorder %s24, 1
    %p231 = scmp.ne.s32.totalorder %s226, %s228
    %p232 = scmp.eq.s32.totalorder %s24, 0
    %p233 = por %p231, %p232
    %p234 = scmp.ne.s32.totalorder %s226, %s228
    %p235 = scmp.eq.s32.totalorder %s29, 1
    %p236 = por %p234, %p235
    %p237 = scmp.ne.s32.totalorder %s228, %s229
    %p238 = scmp.eq.s32.totalorder %s29, 0
    %p239 = por %p237, %p238
    %p240 = scmp.ne.s32.totalorder %s228, %s229
    %p241 = scmp.eq.s32.totalorder %s30, 1
    %p242 = por %p240, %p241
    %p244 = scmp.ne.s32.totalorder %s229, %s243
    %p245 = scmp.eq.s32.totalorder %s30, 0
    %p246 = por %p244, %p245
    %s248 = sadd.s32 %s247, 1
    %p251 = scmp.eq.s32.totalorder %s24, 1
    %p252 = scmp.ne.s32.totalorder %s247, %s249
    %p253 = scmp.eq.s32.totalorder %s24, 0
    %p254 = por %p252, %p253
    %p255 = scmp.ne.s32.totalorder %s247, %s249
    %p256 = scmp.eq.s32.totalorder %s29, 1
    %p257 = por %p255, %p256
    %p258 = scmp.ne.s32.totalorder %s249, %s250
    %p259 = scmp.eq.s32.totalorder %s29, 0
    %p260 = por %p258, %p259
    %p261 = scmp.ne.s32.totalorder %s249, %s250
    %p262 = scmp.eq.s32.totalorder %s30, 1
    %p263 = por %p261, %p262
    %p265 = scmp.ne.s32.totalorder %s250, %s264
    %p266 = scmp.eq.s32.totalorder %s30, 0
    %p267 = por %p265, %p266
    %s269 = sadd.s32 %s268, 1
    %p272 = scmp.eq.s32.totalorder %s24, 1
    %p273 = scmp.ne.s32.totalorder %s268, %s270
    %p274 = scmp.eq.s32.totalorder %s24, 0
    %p275 = por %p273, %p274
    %p276 = scmp.ne.s32.totalorder %s268, %s270
    %p277 = scmp.eq.s32.totalorder %s29, 1
    %p278 = por %p276, %p277
    %p279 = scmp.ne.s32.totalorder %s270, %s271
    %p280 = scmp.eq.s32.totalorder %s29, 0
    %p281 = por %p279, %p280
    %p282 = scmp.ne.s32.totalorder %s270, %s271
    %p283 = scmp.eq.s32.totalorder %s30, 1
    %p284 = por %p282, %p283
    %p286 = scmp.ne.s32.totalorder %s271, %s285
    %p287 = scmp.eq.s32.totalorder %s30, 0
    %p288 = por %p286, %p287
    %s290 = sadd.s32 %s289, 1
    %p293 = scmp.eq.s32.totalorder %s24, 1
    %p294 = scmp.ne.s32.totalorder %s289, %s291
    %p295 = scmp.eq.s32.totalorder %s24, 0
    %p296 = por %p294, %p295
    %p297 = scmp.ne.s32.totalorder %s289, %s291
    %p298 = scmp.eq.s32.totalorder %s29, 1
    %p299 = por %p297, %p298
    %p300 = scmp.ne.s32.totalorder %s291, %s292
    %p301 = scmp.eq.s32.totalorder %s29, 0
    %p302 = por %p300, %p301
    %p303 = scmp.ne.s32.totalorder %s291, %s292
    %p304 = scmp.eq.s32.totalorder %s30, 1
    %p305 = por %p303, %p304
    %p307 = scmp.ne.s32.totalorder %s292, %s306
    %p308 = scmp.eq.s32.totalorder %s30, 0
    %p309 = por %p307, %p308
    %s311 = sadd.s32 %s310, 1
    %p314 = scmp.eq.s32.totalorder %s24, 1
    %p315 = scmp.ne.s32.totalorder %s310, %s312
    %p316 = scmp.eq.s32.totalorder %s24, 0
    %p317 = por %p315, %p316
    %p318 = scmp.ne.s32.totalorder %s310, %s312
    %p319 = scmp.eq.s32.totalorder %s29, 1
    %p320 = por %p318, %p319
    %p321 = scmp.ne.s32.totalorder %s312, %s313
    %p322 = scmp.eq.s32.totalorder %s29, 0
    %p323 = por %p321, %p322
    %p324 = scmp.ne.s32.totalorder %s312, %s313
    %p325 = scmp.eq.s32.totalorder %s30, 1
    %p326 = por %p324, %p325
    %p328 = scmp.ne.s32.totalorder %s313, %s327
    %p329 = scmp.eq.s32.totalorder %s30, 0
    %p330 = por %p328, %p329
    %s332 = sadd.s32 %s331, 1
    %p335 = scmp.eq.s32.totalorder %s24, 1
    %p336 = scmp.ne.s32.totalorder %s331, %s333
    %p337 = scmp.eq.s32.totalorder %s24, 0
    %p338 = por %p336, %p337
    %p339 = scmp.ne.s32.totalorder %s331, %s333
    %p340 = scmp.eq.s32.totalorder %s29, 1
    %p341 = por %p339, %p340
    %p342 = scmp.ne.s32.totalorder %s333, %s334
    %p343 = scmp.eq.s32.totalorder %s29, 0
    %p344 = por %p342, %p343
    %p345 = scmp.ne.s32.totalorder %s333, %s334
    %p346 = scmp.eq.s32.totalorder %s30, 1
    %p347 = por %p345, %p346
    %p349 = scmp.ne.s32.totalorder %s334, %s348
    %p350 = scmp.eq.s32.totalorder %s30, 0
    %p351 = por %p349, %p350
    %s353 = sadd.s32 %s352, 1
    %p356 = scmp.eq.s32.totalorder %s24, 1
    %p357 = scmp.ne.s32.totalorder %s352, %s354
    %p358 = scmp.eq.s32.totalorder %s24, 0
    %p359 = por %p357, %p358
    %p360 = scmp.ne.s32.totalorder %s352, %s354
    %p361 = scmp.eq.s32.totalorder %s29, 1
    %p362 = por %p360, %p361
    %p363 = scmp.ne.s32.totalorder %s354, %s355
    %p364 = scmp.eq.s32.totalorder %s29, 0
    %p365 = por %p363, %p364
    %p366 = scmp.ne.s32.totalorder %s354, %s355
    %p367 = scmp.eq.s32.totalorder %s30, 1
    %p368 = por %p366, %p367
    %p370 = scmp.ne.s32.totalorder %s355, %s369
    %p371 = scmp.eq.s32.totalorder %s30, 0
    %p372 = por %p370, %p371
    %s373 = ssub.s32 %s24, %s31
    %p374 = scmp.eq.s32.totalorder %s373, 0
    %s376 = sadd.s32 %s375, 1
    %s377 = scalar_select %p374, %s375, %s376
    %p380 = pneg %p374
    %p381 = scmp.eq.s32.totalorder %s24, 1
    %p382 = por %p380, %p381
    %p383 = scmp.ne.s32.totalorder %s375, %s378
    %p384 = scmp.eq.s32.totalorder %s24, 0
    %p385 = por %p383, %p384
    %p386 = scmp.ne.s32.totalorder %s375, %s378
    %p387 = scmp.eq.s32.totalorder %s29, 1
    %p388 = por %p386, %p387
    %p389 = scmp.ne.s32.totalorder %s378, %s379
    %p390 = scmp.eq.s32.totalorder %s29, 0
    %p391 = por %p389, %p390
    %p392 = scmp.ne.s32.totalorder %s378, %s379
    %p393 = scmp.eq.s32.totalorder %s30, 1
    %p394 = por %p392, %p393
    %p396 = scmp.ne.s32.totalorder %s379, %s395
    %p397 = scmp.eq.s32.totalorder %s30, 0
    %p398 = por %p396, %p397
    %s399 = ssub.s32 %s24, %s31
    %p400 = scmp.eq.s32.totalorder %s399, 0
    %s402 = sadd.s32 %s401, 1
    %s403 = scalar_select %p400, %s401, %s402
    %p406 = pneg %p400
    %p407 = scmp.eq.s32.totalorder %s24, 1
    %p408 = por %p406, %p407
    %p409 = scmp.ne.s32.totalorder %s401, %s404
    %p410 = scmp.eq.s32.totalorder %s24, 0
    %p411 = por %p409, %p410
    %p412 = scmp.ne.s32.totalorder %s401, %s404
    %p413 = scmp.eq.s32.totalorder %s29, 1
    %p414 = por %p412, %p413
    %p415 = scmp.ne.s32.totalorder %s404, %s405
    %p416 = scmp.eq.s32.totalorder %s29, 0
    %p417 = por %p415, %p416
    %p418 = scmp.ne.s32.totalorder %s404, %s405
    %p419 = scmp.eq.s32.totalorder %s30, 1
    %p420 = por %p418, %p419
    %p422 = scmp.ne.s32.totalorder %s405, %s421
    %p423 = scmp.eq.s32.totalorder %s30, 0
    %p424 = por %p422, %p423
    %p425 = scmp.le.s32.totalorder 1, %s24
    %p426 = scmp.lt.s32.totalorder %s24, 3
    %p427 = pnand %p425, %p426
    %p428 = pneg %p427
    // Predicated region
    $region9: #{simsiam_forward.1} parent=5 // pred_check
      _
    $region10: #{simsiam_forward.1} parent=5 // pred_check_branch
      %430 = sbr.rel (%p427) target = $region12
    $region11: #{simsiam_forward.1} parent=5 // pred_region
      %s431 = ssub.s32 %s24, 1
      // Predicated region
      $region13: #{simsiam_forward.1} parent=11 // pred_check
        %p432 = pneg %p71
      $region14: #{simsiam_forward.1} parent=11 // pred_check_branch
        %434 = sbr.rel (%p432) target = $region16
      $region15: #{simsiam_forward.1} parent=11 // pred_region
        _
      $region16: #{simsiam_forward.1} parent=11 // pred_fallthru
        _
      // Predicated region
      $region17: #{simsiam_forward.1} parent=11 // pred_check
        %p435 = pneg %p92
      $region18: #{simsiam_forward.1} parent=11 // pred_check_branch
        %437 = sbr.rel (%p435) target = $region20
      $region19: #{simsiam_forward.1} parent=11 // pred_region
        _
      $region20: #{simsiam_forward.1} parent=11 // pred_fallthru
        _
      // Predicated region
      $region21: #{simsiam_forward.1} parent=11 // pred_check
        %p438 = pneg %p113
      $region22: #{simsiam_forward.1} parent=11 // pred_check_branch
        %440 = sbr.rel (%p438) target = $region24
      $region23: #{simsiam_forward.1} parent=11 // pred_region
        _
      $region24: #{simsiam_forward.1} parent=11 // pred_fallthru
        _
      // Predicated region
      $region25: #{simsiam_forward.1} parent=11 // pred_check
        %p441 = pneg %p134
      $region26: #{simsiam_forward.1} parent=11 // pred_check_branch
        %443 = sbr.rel (%p441) target = $region28
      $region27: #{simsiam_forward.1} parent=11 // pred_region
        _
      $region28: #{simsiam_forward.1} parent=11 // pred_fallthru
        _
      // Predicated region
      $region29: #{simsiam_forward.1} parent=11 // pred_check
        %p444 = pneg %p155
      $region30: #{simsiam_forward.1} parent=11 // pred_check_branch
        %446 = sbr.rel (%p444) target = $region32
      $region31: #{simsiam_forward.1} parent=11 // pred_region
        _
      $region32: #{simsiam_forward.1} parent=11 // pred_fallthru
        _
      // Predicated region
      $region33: #{simsiam_forward.1} parent=11 // pred_check
        %p447 = pneg %p176
      $region34: #{simsiam_forward.1} parent=11 // pred_check_branch
        %449 = sbr.rel (%p447) target = $region36
      $region35: #{simsiam_forward.1} parent=11 // pred_region
        _
      $region36: #{simsiam_forward.1} parent=11 // pred_fallthru
        _
      // Predicated region
      $region37: #{simsiam_forward.1} parent=11 // pred_check
        %p450 = pneg %p197
      $region38: #{simsiam_forward.1} parent=11 // pred_check_branch
        %452 = sbr.rel (%p450) target = $region40
      $region39: #{simsiam_forward.1} parent=11 // pred_region
        _
      $region40: #{simsiam_forward.1} parent=11 // pred_fallthru
        _
      // Predicated region
      $region41: #{simsiam_forward.1} parent=11 // pred_check
        %p453 = pneg %p218
      $region42: #{simsiam_forward.1} parent=11 // pred_check_branch
        %455 = sbr.rel (%p453) target = $region44
      $region43: #{simsiam_forward.1} parent=11 // pred_region
        _
      $region44: #{simsiam_forward.1} parent=11 // pred_fallthru
        _
      // Predicated region
      $region45: #{simsiam_forward.1} parent=11 // pred_check
        %p456 = pneg %p239
      $region46: #{simsiam_forward.1} parent=11 // pred_check_branch
        %458 = sbr.rel (%p456) target = $region48
      $region47: #{simsiam_forward.1} parent=11 // pred_region
        _
      $region48: #{simsiam_forward.1} parent=11 // pred_fallthru
        _
      // Predicated region
      $region49: #{simsiam_forward.1} parent=11 // pred_check
        %p459 = pneg %p260
      $region50: #{simsiam_forward.1} parent=11 // pred_check_branch
        %461 = sbr.rel (%p459) target = $region52
      $region51: #{simsiam_forward.1} parent=11 // pred_region
        _
      $region52: #{simsiam_forward.1} parent=11 // pred_fallthru
        _
      // Predicated region
      $region53: #{simsiam_forward.1} parent=11 // pred_check
        %p462 = pneg %p281
      $region54: #{simsiam_forward.1} parent=11 // pred_check_branch
        %464 = sbr.rel (%p462) target = $region56
      $region55: #{simsiam_forward.1} parent=11 // pred_region
        _
      $region56: #{simsiam_forward.1} parent=11 // pred_fallthru
        _
      // Predicated region
      $region57: #{simsiam_forward.1} parent=11 // pred_check
        %p465 = pneg %p302
      $region58: #{simsiam_forward.1} parent=11 // pred_check_branch
        %467 = sbr.rel (%p465) target = $region60
      $region59: #{simsiam_forward.1} parent=11 // pred_region
        _
      $region60: #{simsiam_forward.1} parent=11 // pred_fallthru
        _
      // Predicated region
      $region61: #{simsiam_forward.1} parent=11 // pred_check
        %p468 = pneg %p323
      $region62: #{simsiam_forward.1} parent=11 // pred_check_branch
        %470 = sbr.rel (%p468) target = $region64
      $region63: #{simsiam_forward.1} parent=11 // pred_region
        _
      $region64: #{simsiam_forward.1} parent=11 // pred_fallthru
        _
      // Predicated region
      $region65: #{simsiam_forward.1} parent=11 // pred_check
        %p471 = pneg %p344
      $region66: #{simsiam_forward.1} parent=11 // pred_check_branch
        %473 = sbr.rel (%p471) target = $region68
      $region67: #{simsiam_forward.1} parent=11 // pred_region
        _
      $region68: #{simsiam_forward.1} parent=11 // pred_fallthru
        _
      // Predicated region
      $region69: #{simsiam_forward.1} parent=11 // pred_check
        %p474 = pneg %p365
      $region70: #{simsiam_forward.1} parent=11 // pred_check_branch
        %476 = sbr.rel (%p474) target = $region72
      $region71: #{simsiam_forward.1} parent=11 // pred_region
        _
      $region72: #{simsiam_forward.1} parent=11 // pred_fallthru
        _
    $region12: #{simsiam_forward.1} parent=5 // pred_fallthru
      _
    %p477 = scmp.lt.s32.totalorder %s24, 2
    // Predicated region
    $region73: #{simsiam_forward.1} parent=5 // pred_check
      %p478 = pneg %p477
    $region74: #{simsiam_forward.1} parent=5 // pred_check_branch
      %480 = sbr.rel (%p478) target = $region76
    $region75: #{simsiam_forward.1} parent=5 // pred_region
      // Predicated region
      $region77: #{simsiam_forward.1} parent=75 // pred_check
        %p481 = pneg %p44
      $region78: #{simsiam_forward.1} parent=75 // pred_check_branch
        %483 = sbr.rel (%p481) target = $region80
      $region79: #{simsiam_forward.1} parent=75 // pred_region
        %p484 = scmp.lt.s32.totalorder %s24, 1
        %s485 = scalar_select %p484, %s24, 1
        %s486 = smul.addr %s485, 16
        %s487 = smul.addr %s486, 4
        %s488 = scalar_lea.vmem %s0, %s487
      $region80: #{simsiam_forward.1} parent=75 // pred_fallthru
        _
    $region76: #{simsiam_forward.1} parent=5 // pred_fallthru
      _
    %p489 = scmp.le.s32.totalorder 1, %s24
    %p490 = scmp.lt.s32.totalorder %s24, 3
    %p491 = pnand %p489, %p490
    %p492 = pneg %p491
    // Predicated region
    $region81: #{simsiam_forward.1} parent=5 // pred_check
      _
    $region82: #{simsiam_forward.1} parent=5 // pred_check_branch
      %494 = sbr.rel (%p491) target = $region84
    $region83: #{simsiam_forward.1} parent=5 // pred_region
      %s495 = ssub.s32 %s24, 1
      %p496 = scmp.lt.s32.totalorder %s29, 1
      %s497 = scalar_select %p496, %s29, 1
      %s498 = smul.addr %s497, 16
      %s499 = smul.addr %s498, 4
      %s500 = scalar_lea.vmem %s0, %s499
      %p501 = pneg %p50
      %p502 = pneg %p47
      %p503 = pneg %p71
      %p504 = pneg %p68
      %p505 = pneg %p92
      %p506 = pneg %p89
      %p507 = pneg %p113
      %p508 = pneg %p110
      %p509 = pneg %p134
      %p510 = pneg %p131
      %p511 = pneg %p155
      %p512 = pneg %p152
      %p513 = pneg %p176
      %p514 = pneg %p173
      %p515 = pneg %p197
      %p516 = pneg %p194
      %p517 = pneg %p218
      %p518 = pneg %p215
      %p519 = pneg %p239
      %p520 = pneg %p236
      %p521 = pneg %p260
      %p522 = pneg %p257
      %p523 = pneg %p281
      %p524 = pneg %p278
      %p525 = pneg %p302
      %p526 = pneg %p299
      %p527 = pneg %p323
      %p528 = pneg %p320
      %p529 = pneg %p344
      %p530 = pneg %p341
      %p531 = pneg %p365
      %p532 = pneg %p362
      %p533 = pneg %p391
      %p534 = pneg %p388
      %p535 = scmp.lt.s32.totalorder %s29, 1
      %s536 = scalar_select %p535, %s29, 1
      %s537 = smul.addr %s536, 2
      %s538 = scalar_lea.vmem %s16, %s537
      %p539 = pneg %p417
      %p540 = pneg %p414
      %p541 = scmp.lt.s32.totalorder %s29, 1
      %s542 = scalar_select %p541, %s29, 1
      %s543 = smul.addr %s542, 2
      %s544 = scalar_lea.vmem %s17, %s543
      %p545 = scmp.lt.s32.totalorder %s29, 1
      %s546 = scalar_select %p545, %s29, 1
      %s547 = smul.addr %s546, 16
      %s548 = smul.addr %s547, 4
      %s549 = scalar_lea.vmem %s0, %s548
      %p550 = scmp.lt.s32.totalorder %s29, 1
      %s551 = scalar_select %p550, %s29, 1
      %s552 = smul.addr %s551, 2
      %s553 = scalar_lea.vmem %s16, %s552
      %p554 = scmp.lt.s32.totalorder %s29, 1
      %s555 = scalar_select %p554, %s29, 1
      %s556 = smul.addr %s555, 2
      %s557 = scalar_lea.vmem %s17, %s556
      %v559 = vld [vmem:[%s549] sm:$0xf]
      %v560 = vld [vmem:[%s549 + $0x4] sm:$0xf]
      %v561 = vld [vmem:[%s549 + $0x8] sm:$0xf]
      %v562 = vld [vmem:[%s549 + $0xc] sm:$0xf]
      %v563 = vld [vmem:[%s549 + $0x10] sm:$0xf]
      %v564 = vld [vmem:[%s549 + $0x14] sm:$0xf]
      %v565 = vld [vmem:[%s549 + $0x18] sm:$0xf]
      %v566 = vld [vmem:[%s549 + $0x1c] sm:$0xf]
      %v567 = vld [vmem:[%s549 + $0x20] sm:$0xf]
      %v568 = vld [vmem:[%s549 + $0x24] sm:$0xf]
      %v569 = vld [vmem:[%s549 + $0x28] sm:$0xf]
      %v570 = vld [vmem:[%s549 + $0x2c] sm:$0xf]
      %v571 = vld [vmem:[%s549 + $0x30] sm:$0xf]
      %v572 = vld [vmem:[%s549 + $0x34] sm:$0xf]
      %v573 = vld [vmem:[%s549 + $0x38] sm:$0xf]
      %v574 = vld [vmem:[%s549 + $0x3c] sm:$0xf]
      %v575 = vld [vmem:[%s1] sm:$0xf]
      %v576 = vld [vmem:[%s1 + $0x4] sm:$0xf]
      %v577 = vld [vmem:[%s1 + $0x8] sm:$0xf]
      %v578 = vld [vmem:[%s1 + $0xc] sm:$0xf]
      %v579 = vld [vmem:[%s1 + $0x10] sm:$0xf]
      %v580 = vld [vmem:[%s1 + $0x14] sm:$0xf]
      %v581 = vld [vmem:[%s1 + $0x18] sm:$0xf]
      %v582 = vld [vmem:[%s1 + $0x1c] sm:$0xf]
      %v583 = vld [vmem:[%s1 + $0x20] sm:$0xf]
      %v584 = vld [vmem:[%s1 + $0x24] sm:$0xf]
      %v585 = vld [vmem:[%s1 + $0x28] sm:$0xf]
      %v586 = vld [vmem:[%s1 + $0x2c] sm:$0xf]
      %v587 = vld [vmem:[%s1 + $0x30] sm:$0xf]
      %v588 = vld [vmem:[%s1 + $0x34] sm:$0xf]
      %v589 = vld [vmem:[%s1 + $0x38] sm:$0xf]
      %v590 = vld [vmem:[%s1 + $0x3c] sm:$0xf]
      %v607 = vunpack.c.l.b16 %v559
      %v608 = vunpack.c.l.b16 %v560
      %v609 = vunpack.c.l.b16 %v561
      %v610 = vunpack.c.l.b16 %v562
      %v611 = vunpack.c.l.b16 %v563
      %v612 = vunpack.c.l.b16 %v564
      %v613 = vunpack.c.l.b16 %v565
      %v614 = vunpack.c.l.b16 %v566
      %v615 = vunpack.c.l.b16 %v567
      %v616 = vunpack.c.l.b16 %v568
      %v617 = vunpack.c.l.b16 %v569
      %v618 = vunpack.c.l.b16 %v570
      %v619 = vunpack.c.l.b16 %v571
      %v620 = vunpack.c.l.b16 %v572
      %v621 = vunpack.c.l.b16 %v573
      %v622 = vunpack.c.l.b16 %v574
      %v623 = vpack.c.b16 %v608, %v607
      %v624 = vpack.c.b16 %v610, %v609
      %v625 = vpack.c.b16 %v612, %v611
      %v626 = vpack.c.b16 %v614, %v613
      %v627 = vpack.c.b16 %v616, %v615
      %v628 = vpack.c.b16 %v618, %v617
      %v629 = vpack.c.b16 %v620, %v619
      %v630 = vpack.c.b16 %v622, %v621
      %v655 = vunpack.c.l.b16 %v575
      %v656 = vunpack.c.l.b16 %v576
      %v657 = vunpack.c.l.b16 %v577
      %v658 = vunpack.c.l.b16 %v578
      %v659 = vunpack.c.l.b16 %v579
      %v660 = vunpack.c.l.b16 %v580
      %v661 = vunpack.c.l.b16 %v581
      %v662 = vunpack.c.l.b16 %v582
      %v663 = vunpack.c.l.b16 %v583
      %v664 = vunpack.c.l.b16 %v584
      %v665 = vunpack.c.l.b16 %v585
      %v666 = vunpack.c.l.b16 %v586
      %v667 = vunpack.c.l.b16 %v587
      %v668 = vunpack.c.l.b16 %v588
      %v669 = vunpack.c.l.b16 %v589
      %v670 = vunpack.c.l.b16 %v590
      %v671 = vpack.c.b16 %v656, %v655
      %v672 = vpack.c.b16 %v658, %v657
      %v673 = vpack.c.b16 %v660, %v659
      %v674 = vpack.c.b16 %v662, %v661
      %v675 = vpack.c.b16 %v664, %v663
      %v676 = vpack.c.b16 %v666, %v665
      %v677 = vpack.c.b16 %v668, %v667
      %v678 = vpack.c.b16 %v670, %v669
      %687 = vmatprep.subr.bf16.mxu0 0
      %688 = vmatpush1.bf16.msra.mxu0 %v678
      %689 = vmatprep.subr.bf16.mxu0 0
      %690 = vmatpush1.bf16.msra.mxu0 %v677
      %691 = vmatprep.subr.bf16.mxu0 0
      %692 = vmatpush1.bf16.msra.mxu0 %v676
      %693 = vmatprep.subr.bf16.mxu0 0
      %694 = vmatpush1.bf16.msra.mxu0 %v675
      %695 = vmatprep.subr.bf16.mxu0 0
      %696 = vmatpush1.bf16.msra.mxu0 %v674
      %697 = vmatprep.subr.bf16.mxu0 0
      %698 = vmatpush1.bf16.msra.mxu0 %v673
      %699 = vmatprep.subr.bf16.mxu0 0
      %700 = vmatpush1.bf16.msra.mxu0 %v672
      %701 = vmatprep.subr.bf16.mxu0 0
      %702 = vmatpush1.bf16.msra.mxu0 %v671
      %703 = vmatprep.subr.bf16.mxu0 0
      %704 = vmatpush2.bf16.msra.mxu0 0
      %705 = vmatprep.subr.bf16.mxu0 0
      %706 = vmatpush2.bf16.msra.mxu0 0
      %707 = vmatprep.subr.bf16.mxu0 0
      %708 = vmatpush2.bf16.msra.mxu0 0
      %709 = vmatprep.subr.bf16.mxu0 0
      %710 = vmatpush2.bf16.msra.mxu0 0
      %711 = vmatprep.subr.bf16.mxu0 0
      %712 = vmatpush2.bf16.msra.mxu0 0
      %713 = vmatprep.subr.bf16.mxu0 0
      %714 = vmatpush2.bf16.msra.mxu0 0
      %715 = vmatprep.subr.bf16.mxu0 0
      %716 = vmatpush2.bf16.msra.mxu0 0
      %717 = vmatprep.subr.bf16.mxu0 0
      %718 = vmatpush2.bf16.msra.mxu0 0
      %719 = vmatprep.mubr.bf16.mxu0 0
      %720 = vmatmul.mubr.bf16.gmra.mxu0 %v623
      %v721 = vpop.f32.mrf.mxu0
      %v722 = vadd.f32 0.0, %v721
      %v723 = vpop.f32.mrf.mxu0
      %v724 = vpop.f32.mrf.mxu0
      %v725 = vadd.f32 0.0, %v724
      %v726 = vpop.f32.mrf.mxu0
      %727 = vmatprep.mubr.bf16.mxu0 0
      %728 = vmatmul.mubr.bf16.gmra.mxu0 %v624
      %v729 = vpop.f32.mrf.mxu0
      %v730 = vadd.f32 0.0, %v729
      %v731 = vpop.f32.mrf.mxu0
      %v732 = vpop.f32.mrf.mxu0
      %v733 = vadd.f32 0.0, %v732
      %v734 = vpop.f32.mrf.mxu0
      %735 = vmatprep.mubr.bf16.mxu0 0
      %736 = vmatmul.mubr.bf16.gmra.mxu0 %v625
      %v737 = vpop.f32.mrf.mxu0
      %v738 = vadd.f32 0.0, %v737
      %v739 = vpop.f32.mrf.mxu0
      %v740 = vpop.f32.mrf.mxu0
      %v741 = vadd.f32 0.0, %v740
      %v742 = vpop.f32.mrf.mxu0
      %743 = vmatprep.mubr.bf16.mxu0 0
      %744 = vmatmul.mubr.bf16.gmra.mxu0 %v626
      %v745 = vpop.f32.mrf.mxu0
      %v746 = vadd.f32 0.0, %v745
      %v747 = vpop.f32.mrf.mxu0
      %v748 = vpop.f32.mrf.mxu0
      %v749 = vadd.f32 0.0, %v748
      %v750 = vpop.f32.mrf.mxu0
      %751 = vmatprep.mubr.bf16.mxu0 0
      %752 = vmatmul.mubr.bf16.gmra.mxu0 %v627
      %v753 = vpop.f32.mrf.mxu0
      %v754 = vadd.f32 0.0, %v753
      %v755 = vpop.f32.mrf.mxu0
      %v756 = vpop.f32.mrf.mxu0
      %v757 = vadd.f32 0.0, %v756
      %v758 = vpop.f32.mrf.mxu0
      %759 = vmatprep.mubr.bf16.mxu0 0
      %760 = vmatmul.mubr.bf16.gmra.mxu0 %v628
      %v761 = vpop.f32.mrf.mxu0
      %v762 = vadd.f32 0.0, %v761
      %v763 = vpop.f32.mrf.mxu0
      %v764 = vpop.f32.mrf.mxu0
      %v765 = vadd.f32 0.0, %v764
      %v766 = vpop.f32.mrf.mxu0
      %767 = vmatprep.mubr.bf16.mxu0 0
      %768 = vmatmul.mubr.bf16.gmra.mxu0 %v629
      %v769 = vpop.f32.mrf.mxu0
      %v770 = vadd.f32 0.0, %v769
      %v771 = vpop.f32.mrf.mxu0
      %v772 = vpop.f32.mrf.mxu0
      %v773 = vadd.f32 0.0, %v772
      %v774 = vpop.f32.mrf.mxu0
      %775 = vmatprep.mubr.bf16.mxu0 0
      %776 = vmatmul.mubr.bf16.gmra.mxu0 %v630
      %v777 = vpop.f32.mrf.mxu0
      %v778 = vadd.f32 0.0, %v777
      %v779 = vpop.f32.mrf.mxu0
      %v780 = vpop.f32.mrf.mxu0
      %v781 = vadd.f32 0.0, %v780
      %v782 = vpop.f32.mrf.mxu0
      %783 = vdwg.mxu0
      %v784 = vld [vmem:[%s2] sm:$0x1]
      %v785 = vld [vmem:[%s3] sm:$0x1]
      %v786 = vadd.f32 %v722, %v725
      %v787 = vadd.f32 %v786, %v730
      %v788 = vadd.f32 %v787, %v733
      %v789 = vadd.f32 %v788, %v738
      %v790 = vadd.f32 %v789, %v741
      %v791 = vadd.f32 %v790, %v746
      %v792 = vadd.f32 %v791, %v749
      %v793 = vadd.f32 %v792, %v754
      %v794 = vadd.f32 %v793, %v757
      %v795 = vadd.f32 %v794, %v762
      %v796 = vadd.f32 %v795, %v765
      %v797 = vadd.f32 %v796, %v770
      %v798 = vadd.f32 %v797, %v773
      %v799 = vadd.f32 %v798, %v778
      %v800 = vadd.f32 %v799, %v781
      %v801 = vrot.slane %v800, 4
      %v802 = vadd.f32 %v800, %v801
      %v803 = vrot.slane %v802, 2
      %v804 = vadd.f32 %v802, %v803
      %v805 = vrot.slane %v804, 1
      %v806 = vadd.f32 %v804, %v805
      %v807 = vrcp.pop 128.0
      %v808 = vmul.f32 %v806, %v807
      %v809 = vsub.f32 %v722, %v808
      %v810 = vsub.f32 %v725, %v808
      %v811 = vsub.f32 %v730, %v808
      %v812 = vsub.f32 %v733, %v808
      %v813 = vsub.f32 %v738, %v808
      %v814 = vsub.f32 %v741, %v808
      %v815 = vsub.f32 %v746, %v808
      %v816 = vsub.f32 %v749, %v808
      %v817 = vsub.f32 %v754, %v808
      %v818 = vsub.f32 %v757, %v808
      %v819 = vsub.f32 %v762, %v808
      %v820 = vsub.f32 %v765, %v808
      %v821 = vsub.f32 %v770, %v808
      %v822 = vsub.f32 %v773, %v808
      %v823 = vsub.f32 %v778, %v808
      %v824 = vsub.f32 %v781, %v808
      %v825 = vmul.f32 %v809, %v809
      %v826 = vmul.f32 %v810, %v810
      %v827 = vmul.f32 %v811, %v811
      %v828 = vmul.f32 %v812, %v812
      %v829 = vmul.f32 %v813, %v813
      %v830 = vmul.f32 %v814, %v814
      %v831 = vmul.f32 %v815, %v815
      %v832 = vmul.f32 %v816, %v816
      %v833 = vmul.f32 %v817, %v817
      %v834 = vmul.f32 %v818, %v818
      %v835 = vmul.f32 %v819, %v819
      %v836 = vmul.f32 %v820, %v820
      %v837 = vmul.f32 %v821, %v821
      %v838 = vmul.f32 %v822, %v822
      %v839 = vmul.f32 %v823, %v823
      %v840 = vmul.f32 %v824, %v824
      %v841 = vadd.f32 %v825, %v826
      %v842 = vadd.f32 %v841, %v827
      %v843 = vadd.f32 %v842, %v828
      %v844 = vadd.f32 %v843, %v829
      %v845 = vadd.f32 %v844, %v830
      %v846 = vadd.f32 %v845, %v831
      %v847 = vadd.f32 %v846, %v832
      %v848 = vadd.f32 %v847, %v833
      %v849 = vadd.f32 %v848, %v834
      %v850 = vadd.f32 %v849, %v835
      %v851 = vadd.f32 %v850, %v836
      %v852 = vadd.f32 %v851, %v837
      %v853 = vadd.f32 %v852, %v838
      %v854 = vadd.f32 %v853, %v839
      %v855 = vadd.f32 %v854, %v840
      %v856 = vrot.slane %v855, 4
      %v857 = vadd.f32 %v855, %v856
      %v858 = vrot.slane %v857, 2
      %v859 = vadd.f32 %v857, %v858
      %v860 = vrot.slane %v859, 1
      %v861 = vadd.f32 %v859, %v860
      %v862 = vmul.f32 %v861, %v807
      %v863 = vadd.f32 %v862, 1e-05
      %v864 = vrsqrt.pop %v863
      %v865 = vmul.f32 %v809, %v864
      %v866 = vmul.f32 %v810, %v864
      %v867 = vmul.f32 %v811, %v864
      %v868 = vmul.f32 %v812, %v864
      %v869 = vmul.f32 %v813, %v864
      %v870 = vmul.f32 %v814, %v864
      %v871 = vmul.f32 %v815, %v864
      %v872 = vmul.f32 %v816, %v864
      %v873 = vmul.f32 %v817, %v864
      %v874 = vmul.f32 %v818, %v864
      %v875 = vmul.f32 %v819, %v864
      %v876 = vmul.f32 %v820, %v864
      %v877 = vmul.f32 %v821, %v864
      %v878 = vmul.f32 %v822, %v864
      %v879 = vmul.f32 %v823, %v864
      %v880 = vmul.f32 %v824, %v864
      %v882 = vlaneseq
      %v883 = vshrl.u32 %v882, 7
      %v884 = vsub.s32 0, %v883
      %v885 = vrot.slane %v784, %v884
      %v887 = vmul.f32 %v865, %v885
      %v888 = vmul.f32 %v866, %v885
      %v889 = vmul.f32 %v867, %v885
      %v890 = vmul.f32 %v868, %v885
      %v891 = vmul.f32 %v869, %v885
      %v892 = vmul.f32 %v870, %v885
      %v893 = vmul.f32 %v871, %v885
      %v894 = vmul.f32 %v872, %v885
      %v895 = vmul.f32 %v873, %v885
      %v896 = vmul.f32 %v874, %v885
      %v897 = vmul.f32 %v875, %v885
      %v898 = vmul.f32 %v876, %v885
      %v899 = vmul.f32 %v877, %v885
      %v900 = vmul.f32 %v878, %v885
      %v901 = vmul.f32 %v879, %v885
      %v902 = vmul.f32 %v880, %v885
      %v904 = vlaneseq
      %v905 = vshrl.u32 %v904, 7
      %v906 = vsub.s32 0, %v905
      %v907 = vrot.slane %v785, %v906
      %v909 = vadd.f32 %v887, %v907
      %v910 = vadd.f32 %v888, %v907
      %v911 = vadd.f32 %v889, %v907
      %v912 = vadd.f32 %v890, %v907
      %v913 = vadd.f32 %v891, %v907
      %v914 = vadd.f32 %v892, %v907
      %v915 = vadd.f32 %v893, %v907
      %v916 = vadd.f32 %v894, %v907
      %v917 = vadd.f32 %v895, %v907
      %v918 = vadd.f32 %v896, %v907
      %v919 = vadd.f32 %v897, %v907
      %v920 = vadd.f32 %v898, %v907
      %v921 = vadd.f32 %v899, %v907
      %v922 = vadd.f32 %v900, %v907
      %v923 = vadd.f32 %v901, %v907
      %v924 = vadd.f32 %v902, %v907
      %v925 = vmax.f32 %v909, 0.0
      %v926 = vmax.f32 %v910, 0.0
      %v927 = vmax.f32 %v911, 0.0
      %v928 = vmax.f32 %v912, 0.0
      %v929 = vmax.f32 %v913, 0.0
      %v930 = vmax.f32 %v914, 0.0
      %v931 = vmax.f32 %v915, 0.0
      %v932 = vmax.f32 %v916, 0.0
      %v933 = vmax.f32 %v917, 0.0
      %v934 = vmax.f32 %v918, 0.0
      %v935 = vmax.f32 %v919, 0.0
      %v936 = vmax.f32 %v920, 0.0
      %v937 = vmax.f32 %v921, 0.0
      %v938 = vmax.f32 %v922, 0.0
      %v939 = vmax.f32 %v923, 0.0
      %v940 = vmax.f32 %v924, 0.0
      %v941 = vadd.f32 %v925, %v926
      %v942 = vadd.f32 %v941, %v927
      %v943 = vadd.f32 %v942, %v928
      %v944 = vadd.f32 %v943, %v929
      %v945 = vadd.f32 %v944, %v930
      %v946 = vadd.f32 %v945, %v931
      %v947 = vadd.f32 %v946, %v932
      %v948 = vrot.slane %v947, 4
      %v949 = vadd.f32 %v947, %v948
      %v950 = vrot.slane %v949, 2
      %v951 = vadd.f32 %v949, %v950
      %v952 = vrot.slane %v951, 1
      %v953 = vadd.f32 %v951, %v952
      %v954 = vadd.f32 %v933, %v934
      %v955 = vadd.f32 %v954, %v935
      %v956 = vadd.f32 %v955, %v936
      %v957 = vadd.f32 %v956, %v937
      %v958 = vadd.f32 %v957, %v938
      %v959 = vadd.f32 %v958, %v939
      %v960 = vadd.f32 %v959, %v940
      %v961 = vrot.slane %v960, 4
      %v962 = vadd.f32 %v960, %v961
      %v963 = vrot.slane %v962, 2
      %v964 = vadd.f32 %v962, %v963
      %v965 = vrot.slane %v964, 1
      %v966 = vadd.f32 %v964, %v965
      %v967 = vrcp.pop 64.0
      %v968 = vmul.f32 %v953, %v967
      %v969 = vmul.f32 %v966, %v967
      %v970 = vpack.c.bf16 %v968, %v968
      %v971 = vpack.c.bf16 %v969, %v969
      %v972 = vld [vmem:[%s4] sm:$0xf]
      %v973 = vld [vmem:[%s4 + $0x4] sm:$0xf]
      %v974 = vld [vmem:[%s4 + $0x8] sm:$0xf]
      %v975 = vld [vmem:[%s4 + $0xc] sm:$0xf]
      %v976 = vld [vmem:[%s4 + $0x10] sm:$0xf]
      %v977 = vld [vmem:[%s4 + $0x14] sm:$0xf]
      %v978 = vld [vmem:[%s4 + $0x18] sm:$0xf]
      %v979 = vld [vmem:[%s4 + $0x1c] sm:$0xf]
      %v980 = vld [vmem:[%s4 + $0x20] sm:$0xf]
      %v981 = vld [vmem:[%s4 + $0x24] sm:$0xf]
      %v982 = vld [vmem:[%s4 + $0x28] sm:$0xf]
      %v983 = vld [vmem:[%s4 + $0x2c] sm:$0xf]
      %v984 = vld [vmem:[%s4 + $0x30] sm:$0xf]
      %v985 = vld [vmem:[%s4 + $0x34] sm:$0xf]
      %v986 = vld [vmem:[%s4 + $0x38] sm:$0xf]
      %v987 = vld [vmem:[%s4 + $0x3c] sm:$0xf]
      %v990 = vunpack.c.l.b16 %v970
      %v991 = vunpack.c.l.b16 %v971
      %vm992 = vcmask 1041409
      %v993 = vsel %vm992, %v991, %v990
      %v994 = vpack.c.b16 %v993, %v993
      %v1012 = vunpack.c.l.b16 %v972
      %v1013 = vunpack.c.l.b16 %v973
      %v1014 = vunpack.c.l.b16 %v974
      %v1015 = vunpack.c.l.b16 %v975
      %v1016 = vunpack.c.l.b16 %v976
      %v1017 = vunpack.c.l.b16 %v977
      %v1018 = vunpack.c.l.b16 %v978
      %v1019 = vunpack.c.l.b16 %v979
      %v1020 = vunpack.c.l.b16 %v980
      %v1021 = vunpack.c.l.b16 %v981
      %v1022 = vunpack.c.l.b16 %v982
      %v1023 = vunpack.c.l.b16 %v983
      %v1024 = vunpack.c.l.b16 %v984
      %v1025 = vunpack.c.l.b16 %v985
      %v1026 = vunpack.c.l.b16 %v986
      %v1027 = vunpack.c.l.b16 %v987
      %v1028 = vpack.c.b16 %v1013, %v1012
      %v1029 = vpack.c.b16 %v1015, %v1014
      %v1030 = vpack.c.b16 %v1017, %v1016
      %v1031 = vpack.c.b16 %v1019, %v1018
      %v1032 = vpack.c.b16 %v1021, %v1020
      %v1033 = vpack.c.b16 %v1023, %v1022
      %v1034 = vpack.c.b16 %v1025, %v1024
      %v1035 = vpack.c.b16 %v1027, %v1026
      %1044 = vmatprep.subr.bf16.mxu0 0
      %1045 = vmatpush1.bf16.msra.mxu0 %v1035
      %1046 = vmatprep.subr.bf16.mxu0 0
      %1047 = vmatpush1.bf16.msra.mxu0 %v1034
      %1048 = vmatprep.subr.bf16.mxu0 0
      %1049 = vmatpush1.bf16.msra.mxu0 %v1033
      %1050 = vmatprep.subr.bf16.mxu0 0
      %1051 = vmatpush1.bf16.msra.mxu0 %v1032
      %1052 = vmatprep.subr.bf16.mxu0 0
      %1053 = vmatpush1.bf16.msra.mxu0 %v1031
      %1054 = vmatprep.subr.bf16.mxu0 0
      %1055 = vmatpush1.bf16.msra.mxu0 %v1030
      %1056 = vmatprep.subr.bf16.mxu0 0
      %1057 = vmatpush1.bf16.msra.mxu0 %v1029
      %1058 = vmatprep.subr.bf16.mxu0 0
      %1059 = vmatpush1.bf16.msra.mxu0 %v1028
      %1060 = vmatprep.subr.bf16.mxu0 0
      %1061 = vmatpush2.bf16.msra.mxu0 0
      %1062 = vmatprep.subr.bf16.mxu0 0
      %1063 = vmatpush2.bf16.msra.mxu0 0
      %1064 = vmatprep.subr.bf16.mxu0 0
      %1065 = vmatpush2.bf16.msra.mxu0 0
      %1066 = vmatprep.subr.bf16.mxu0 0
      %1067 = vmatpush2.bf16.msra.mxu0 0
      %1068 = vmatprep.subr.bf16.mxu0 0
      %1069 = vmatpush2.bf16.msra.mxu0 0
      %1070 = vmatprep.subr.bf16.mxu0 0
      %1071 = vmatpush2.bf16.msra.mxu0 0
      %1072 = vmatprep.subr.bf16.mxu0 0
      %1073 = vmatpush2.bf16.msra.mxu0 0
      %1074 = vmatprep.subr.bf16.mxu0 0
      %1075 = vmatpush2.bf16.msra.mxu0 0
      %1076 = vmatprep.mubr.bf16.mxu0 0
      %1077 = vmatmul.mubr.bf16.gmra.mxu0 %v994
      %v1078 = vpop.f32.mrf.mxu0
      %v1079 = vadd.f32 0.0, %v1078
      %v1080 = vpop.f32.mrf.mxu0
      %v1081 = vpop.f32.mrf.mxu0
      %v1082 = vpop.f32.mrf.mxu0
      %1083 = vdwg.mxu0
      %v1084 = vld [vmem:[%s5] sm:$0x1]
      %v1085 = vld [vmem:[%s6] sm:$0x1]
      %vm1086 = vcmask 1041408
      %v1087 = vsel %vm1086, %v1079, 0.0
      %v1088 = vrot.slane %v1087, 4
      %v1089 = vadd.f32 %v1087, %v1088
      %v1090 = vrot.slane %v1089, 2
      %v1091 = vadd.f32 %v1089, %v1090
      %v1092 = vrot.slane %v1091, 1
      %v1093 = vadd.f32 %v1091, %v1092
      %v1094 = vrcp.pop 2.0
      %v1095 = vmul.f32 %v1093, %v1094
      %v1096 = vsub.f32 %v1079, %v1095
      %v1097 = vmul.f32 %v1096, %v1096
      %v1098 = vsel %vm1086, %v1097, 0.0
      %v1099 = vrot.slane %v1098, 4
      %v1100 = vadd.f32 %v1098, %v1099
      %v1101 = vrot.slane %v1100, 2
      %v1102 = vadd.f32 %v1100, %v1101
      %v1103 = vrot.slane %v1102, 1
      %v1104 = vadd.f32 %v1102, %v1103
      %v1105 = vmul.f32 %v1104, %v1094
      %v1106 = vadd.f32 %v1105, 1e-05
      %v1107 = vrsqrt.pop %v1106
      %v1108 = vmul.f32 %v1096, %v1107
      %v1110 = vlaneseq
      %v1111 = vshrl.u32 %v1110, 7
      %v1112 = vsub.s32 0, %v1111
      %v1113 = vrot.slane %v1084, %v1112
      %v1115 = vmul.f32 %v1108, %v1113
      %v1117 = vlaneseq
      %v1118 = vshrl.u32 %v1117, 7
      %v1119 = vsub.s32 0, %v1118
      %v1120 = vrot.slane %v1085, %v1119
      %v1122 = vadd.f32 %v1115, %v1120
      %v1123 = vmax.f32 %v1122, 0.0
      %v1124 = vpack.c.bf16 %v1123, %v1123
      %v1125 = vld [vmem:[%s7] sm:$0xf]
      %v1126 = vld [vmem:[%s7 + $0x4] sm:$0xf]
      %v1127 = vld [vmem:[%s7 + $0x8] sm:$0xf]
      %v1128 = vld [vmem:[%s7 + $0xc] sm:$0xf]
      %v1129 = vld [vmem:[%s7 + $0x10] sm:$0xf]
      %v1130 = vld [vmem:[%s7 + $0x14] sm:$0xf]
      %v1131 = vld [vmem:[%s7 + $0x18] sm:$0xf]
      %v1132 = vld [vmem:[%s7 + $0x1c] sm:$0xf]
      %v1133 = vld [vmem:[%s7 + $0x20] sm:$0xf]
      %v1134 = vld [vmem:[%s7 + $0x24] sm:$0xf]
      %v1135 = vld [vmem:[%s7 + $0x28] sm:$0xf]
      %v1136 = vld [vmem:[%s7 + $0x2c] sm:$0xf]
      %v1137 = vld [vmem:[%s7 + $0x30] sm:$0xf]
      %v1138 = vld [vmem:[%s7 + $0x34] sm:$0xf]
      %v1139 = vld [vmem:[%s7 + $0x38] sm:$0xf]
      %v1140 = vld [vmem:[%s7 + $0x3c] sm:$0xf]
      %v1157 = vunpack.c.l.b16 %v1125
      %v1158 = vunpack.c.l.b16 %v1126
      %v1159 = vunpack.c.l.b16 %v1127
      %v1160 = vunpack.c.l.b16 %v1128
      %v1161 = vunpack.c.l.b16 %v1129
      %v1162 = vunpack.c.l.b16 %v1130
      %v1163 = vunpack.c.l.b16 %v1131
      %v1164 = vunpack.c.l.b16 %v1132
      %v1165 = vunpack.c.l.b16 %v1133
      %v1166 = vunpack.c.l.b16 %v1134
      %v1167 = vunpack.c.l.b16 %v1135
      %v1168 = vunpack.c.l.b16 %v1136
      %v1169 = vunpack.c.l.b16 %v1137
      %v1170 = vunpack.c.l.b16 %v1138
      %v1171 = vunpack.c.l.b16 %v1139
      %v1172 = vunpack.c.l.b16 %v1140
      %v1173 = vpack.c.b16 %v1158, %v1157
      %v1174 = vpack.c.b16 %v1160, %v1159
      %v1175 = vpack.c.b16 %v1162, %v1161
      %v1176 = vpack.c.b16 %v1164, %v1163
      %v1177 = vpack.c.b16 %v1166, %v1165
      %v1178 = vpack.c.b16 %v1168, %v1167
      %v1179 = vpack.c.b16 %v1170, %v1169
      %v1180 = vpack.c.b16 %v1172, %v1171
      %1189 = vmatprep.subr.bf16.mxu0 0
      %1190 = vmatpush1.bf16.msra.mxu0 %v1180
      %1191 = vmatprep.subr.bf16.mxu0 0
      %1192 = vmatpush1.bf16.msra.mxu0 %v1179
      %1193 = vmatprep.subr.bf16.mxu0 0
      %1194 = vmatpush1.bf16.msra.mxu0 %v1178
      %1195 = vmatprep.subr.bf16.mxu0 0
      %1196 = vmatpush1.bf16.msra.mxu0 %v1177
      %1197 = vmatprep.subr.bf16.mxu0 0
      %1198 = vmatpush1.bf16.msra.mxu0 %v1176
      %1199 = vmatprep.subr.bf16.mxu0 0
      %1200 = vmatpush1.bf16.msra.mxu0 %v1175
      %1201 = vmatprep.subr.bf16.mxu0 0
      %1202 = vmatpush1.bf16.msra.mxu0 %v1174
      %1203 = vmatprep.subr.bf16.mxu0 0
      %1204 = vmatpush1.bf16.msra.mxu0 %v1173
      %1205 = vmatprep.subr.bf16.mxu0 0
      %1206 = vmatpush2.bf16.msra.mxu0 0
      %1207 = vmatprep.subr.bf16.mxu0 0
      %1208 = vmatpush2.bf16.msra.mxu0 0
      %1209 = vmatprep.subr.bf16.mxu0 0
      %1210 = vmatpush2.bf16.msra.mxu0 0
      %1211 = vmatprep.subr.bf16.mxu0 0
      %1212 = vmatpush2.bf16.msra.mxu0 0
      %1213 = vmatprep.subr.bf16.mxu0 0
      %1214 = vmatpush2.bf16.msra.mxu0 0
      %1215 = vmatprep.subr.bf16.mxu0 0
      %1216 = vmatpush2.bf16.msra.mxu0 0
      %1217 = vmatprep.subr.bf16.mxu0 0
      %1218 = vmatpush2.bf16.msra.mxu0 0
      %1219 = vmatprep.subr.bf16.mxu0 0
      %1220 = vmatpush2.bf16.msra.mxu0 0
      %1221 = vmatprep.mubr.bf16.mxu0 0
      %1222 = vmatmul.mubr.bf16.gmra.mxu0 %v1124
      %v1223 = vpop.f32.mrf.mxu0
      %v1224 = vadd.f32 0.0, %v1223
      %v1225 = vpop.f32.mrf.mxu0
      %v1226 = vpop.f32.mrf.mxu0
      %v1227 = vpop.f32.mrf.mxu0
      %1228 = vdwg.mxu0
      %v1229 = vld [vmem:[%s8] sm:$0x1]
      %v1230 = vld [vmem:[%s9] sm:$0x1]
      %v1231 = vsel %vm1086, %v1224, 0.0
      %v1232 = vrot.slane %v1231, 4
      %v1233 = vadd.f32 %v1231, %v1232
      %v1234 = vrot.slane %v1233, 2
      %v1235 = vadd.f32 %v1233, %v1234
      %v1236 = vrot.slane %v1235, 1
      %v1237 = vadd.f32 %v1235, %v1236
      %v1238 = vmul.f32 %v1237, %v1094
      %v1239 = vsub.f32 %v1224, %v1238
      %v1240 = vmul.f32 %v1239, %v1239
      %v1241 = vsel %vm1086, %v1240, 0.0
      %v1242 = vrot.slane %v1241, 4
      %v1243 = vadd.f32 %v1241, %v1242
      %v1244 = vrot.slane %v1243, 2
      %v1245 = vadd.f32 %v1243, %v1244
      %v1246 = vrot.slane %v1245, 1
      %v1247 = vadd.f32 %v1245, %v1246
      %v1248 = vmul.f32 %v1247, %v1094
      %v1249 = vadd.f32 %v1248, 1e-05
      %v1250 = vrsqrt.pop %v1249
      %v1251 = vmul.f32 %v1239, %v1250
      %v1253 = vlaneseq
      %v1254 = vshrl.u32 %v1253, 7
      %v1255 = vsub.s32 0, %v1254
      %v1256 = vrot.slane %v1229, %v1255
      %v1258 = vmul.f32 %v1251, %v1256
      %v1260 = vlaneseq
      %v1261 = vshrl.u32 %v1260, 7
      %v1262 = vsub.s32 0, %v1261
      %v1263 = vrot.slane %v1230, %v1262
      %v1265 = vadd.f32 %v1258, %v1263
      %v1266 = vmax.f32 %v1265, 0.0
      %v1267 = vpack.c.bf16 %v1266, %v1266
      %v1268 = vld [vmem:[%s10] sm:$0xf]
      %v1269 = vld [vmem:[%s10 + $0x4] sm:$0xf]
      %v1270 = vld [vmem:[%s10 + $0x8] sm:$0xf]
      %v1271 = vld [vmem:[%s10 + $0xc] sm:$0xf]
      %v1272 = vld [vmem:[%s10 + $0x10] sm:$0xf]
      %v1273 = vld [vmem:[%s10 + $0x14] sm:$0xf]
      %v1274 = vld [vmem:[%s10 + $0x18] sm:$0xf]
      %v1275 = vld [vmem:[%s10 + $0x1c] sm:$0xf]
      %v1276 = vld [vmem:[%s10 + $0x20] sm:$0xf]
      %v1277 = vld [vmem:[%s10 + $0x24] sm:$0xf]
      %v1278 = vld [vmem:[%s10 + $0x28] sm:$0xf]
      %v1279 = vld [vmem:[%s10 + $0x2c] sm:$0xf]
      %v1280 = vld [vmem:[%s10 + $0x30] sm:$0xf]
      %v1281 = vld [vmem:[%s10 + $0x34] sm:$0xf]
      %v1282 = vld [vmem:[%s10 + $0x38] sm:$0xf]
      %v1283 = vld [vmem:[%s10 + $0x3c] sm:$0xf]
      %v1300 = vunpack.c.l.b16 %v1268
      %v1301 = vunpack.c.l.b16 %v1269
      %v1302 = vunpack.c.l.b16 %v1270
      %v1303 = vunpack.c.l.b16 %v1271
      %v1304 = vunpack.c.l.b16 %v1272
      %v1305 = vunpack.c.l.b16 %v1273
      %v1306 = vunpack.c.l.b16 %v1274
      %v1307 = vunpack.c.l.b16 %v1275
      %v1308 = vunpack.c.l.b16 %v1276
      %v1309 = vunpack.c.l.b16 %v1277
      %v1310 = vunpack.c.l.b16 %v1278
      %v1311 = vunpack.c.l.b16 %v1279
      %v1312 = vunpack.c.l.b16 %v1280
      %v1313 = vunpack.c.l.b16 %v1281
      %v1314 = vunpack.c.l.b16 %v1282
      %v1315 = vunpack.c.l.b16 %v1283
      %v1316 = vpack.c.b16 %v1301, %v1300
      %v1317 = vpack.c.b16 %v1303, %v1302
      %v1318 = vpack.c.b16 %v1305, %v1304
      %v1319 = vpack.c.b16 %v1307, %v1306
      %v1320 = vpack.c.b16 %v1309, %v1308
      %v1321 = vpack.c.b16 %v1311, %v1310
      %v1322 = vpack.c.b16 %v1313, %v1312
      %v1323 = vpack.c.b16 %v1315, %v1314
      %1332 = vmatprep.subr.bf16.mxu0 0
      %1333 = vmatpush1.bf16.msra.mxu0 %v1323
      %1334 = vmatprep.subr.bf16.mxu0 0
      %1335 = vmatpush1.bf16.msra.mxu0 %v1322
      %1336 = vmatprep.subr.bf16.mxu0 0
      %1337 = vmatpush1.bf16.msra.mxu0 %v1321
      %1338 = vmatprep.subr.bf16.mxu0 0
      %1339 = vmatpush1.bf16.msra.mxu0 %v1320
      %1340 = vmatprep.subr.bf16.mxu0 0
      %1341 = vmatpush1.bf16.msra.mxu0 %v1319
      %1342 = vmatprep.subr.bf16.mxu0 0
      %1343 = vmatpush1.bf16.msra.mxu0 %v1318
      %1344 = vmatprep.subr.bf16.mxu0 0
      %1345 = vmatpush1.bf16.msra.mxu0 %v1317
      %1346 = vmatprep.subr.bf16.mxu0 0
      %1347 = vmatpush1.bf16.msra.mxu0 %v1316
      %1348 = vmatprep.subr.bf16.mxu0 0
      %1349 = vmatpush2.bf16.msra.mxu0 0
      %1350 = vmatprep.subr.bf16.mxu0 0
      %1351 = vmatpush2.bf16.msra.mxu0 0
      %1352 = vmatprep.subr.bf16.mxu0 0
      %1353 = vmatpush2.bf16.msra.mxu0 0
      %1354 = vmatprep.subr.bf16.mxu0 0
      %1355 = vmatpush2.bf16.msra.mxu0 0
      %1356 = vmatprep.subr.bf16.mxu0 0
      %1357 = vmatpush2.bf16.msra.mxu0 0
      %1358 = vmatprep.subr.bf16.mxu0 0
      %1359 = vmatpush2.bf16.msra.mxu0 0
      %1360 = vmatprep.subr.bf16.mxu0 0
      %1361 = vmatpush2.bf16.msra.mxu0 0
      %1362 = vmatprep.subr.bf16.mxu0 0
      %1363 = vmatpush2.bf16.msra.mxu0 0
      %1364 = vmatprep.mubr.bf16.mxu0 0
      %1365 = vmatmul.mubr.bf16.gmra.mxu0 %v1267
      %v1366 = vpop.f32.mrf.mxu0
      %v1367 = vadd.f32 0.0, %v1366
      %v1368 = vpop.f32.mrf.mxu0
      %v1369 = vpop.f32.mrf.mxu0
      %v1370 = vpop.f32.mrf.mxu0
      %1371 = vdwg.mxu0
      %v1372 = vsel %vm1086, %v1367, 0.0
      %v1373 = vrot.slane %v1372, 4
      %v1374 = vadd.f32 %v1372, %v1373
      %v1375 = vrot.slane %v1374, 2
      %v1376 = vadd.f32 %v1374, %v1375
      %v1377 = vrot.slane %v1376, 1
      %v1378 = vadd.f32 %v1376, %v1377
      %v1379 = vmul.f32 %v1378, %v1094
      %v1380 = vsub.f32 %v1367, %v1379
      %v1381 = vmul.f32 %v1380, %v1380
      %v1382 = vsel %vm1086, %v1381, 0.0
      %v1383 = vrot.slane %v1382, 4
      %v1384 = vadd.f32 %v1382, %v1383
      %v1385 = vrot.slane %v1384, 2
      %v1386 = vadd.f32 %v1384, %v1385
      %v1387 = vrot.slane %v1386, 1
      %v1388 = vadd.f32 %v1386, %v1387
      %v1389 = vmul.f32 %v1388, %v1094
      %v1390 = vadd.f32 %v1389, 1e-05
      %v1391 = vrsqrt.pop %v1390
      %v1392 = vmul.f32 %v1380, %v1391
      %1393 = vst [vmem:[%s553] sm:$0x3] %v1392
      %v1394 = vpack.c.bf16 %v1392, %v1392
      %v1395 = vld [vmem:[%s11] sm:$0xf]
      %v1396 = vld [vmem:[%s11 + $0x4] sm:$0xf]
      %v1397 = vld [vmem:[%s11 + $0x8] sm:$0xf]
      %v1398 = vld [vmem:[%s11 + $0xc] sm:$0xf]
      %v1399 = vld [vmem:[%s11 + $0x10] sm:$0xf]
      %v1400 = vld [vmem:[%s11 + $0x14] sm:$0xf]
      %v1401 = vld [vmem:[%s11 + $0x18] sm:$0xf]
      %v1402 = vld [vmem:[%s11 + $0x1c] sm:$0xf]
      %v1403 = vld [vmem:[%s11 + $0x20] sm:$0xf]
      %v1404 = vld [vmem:[%s11 + $0x24] sm:$0xf]
      %v1405 = vld [vmem:[%s11 + $0x28] sm:$0xf]
      %v1406 = vld [vmem:[%s11 + $0x2c] sm:$0xf]
      %v1407 = vld [vmem:[%s11 + $0x30] sm:$0xf]
      %v1408 = vld [vmem:[%s11 + $0x34] sm:$0xf]
      %v1409 = vld [vmem:[%s11 + $0x38] sm:$0xf]
      %v1410 = vld [vmem:[%s11 + $0x3c] sm:$0xf]
      %v1427 = vunpack.c.l.b16 %v1395
      %v1428 = vunpack.c.l.b16 %v1396
      %v1429 = vunpack.c.l.b16 %v1397
      %v1430 = vunpack.c.l.b16 %v1398
      %v1431 = vunpack.c.l.b16 %v1399
      %v1432 = vunpack.c.l.b16 %v1400
      %v1433 = vunpack.c.l.b16 %v1401
      %v1434 = vunpack.c.l.b16 %v1402
      %v1435 = vunpack.c.l.b16 %v1403
      %v1436 = vunpack.c.l.b16 %v1404
      %v1437 = vunpack.c.l.b16 %v1405
      %v1438 = vunpack.c.l.b16 %v1406
      %v1439 = vunpack.c.l.b16 %v1407
      %v1440 = vunpack.c.l.b16 %v1408
      %v1441 = vunpack.c.l.b16 %v1409
      %v1442 = vunpack.c.l.b16 %v1410
      %v1443 = vpack.c.b16 %v1428, %v1427
      %v1444 = vpack.c.b16 %v1430, %v1429
      %v1445 = vpack.c.b16 %v1432, %v1431
      %v1446 = vpack.c.b16 %v1434, %v1433
      %v1447 = vpack.c.b16 %v1436, %v1435
      %v1448 = vpack.c.b16 %v1438, %v1437
      %v1449 = vpack.c.b16 %v1440, %v1439
      %v1450 = vpack.c.b16 %v1442, %v1441
      %1459 = vmatprep.subr.bf16.mxu0 0
      %1460 = vmatpush1.bf16.msra.mxu0 %v1450
      %1461 = vmatprep.subr.bf16.mxu0 0
      %1462 = vmatpush1.bf16.msra.mxu0 %v1449
      %1463 = vmatprep.subr.bf16.mxu0 0
      %1464 = vmatpush1.bf16.msra.mxu0 %v1448
      %1465 = vmatprep.subr.bf16.mxu0 0
      %1466 = vmatpush1.bf16.msra.mxu0 %v1447
      %1467 = vmatprep.subr.bf16.mxu0 0
      %1468 = vmatpush1.bf16.msra.mxu0 %v1446
      %1469 = vmatprep.subr.bf16.mxu0 0
      %1470 = vmatpush1.bf16.msra.mxu0 %v1445
      %1471 = vmatprep.subr.bf16.mxu0 0
      %1472 = vmatpush1.bf16.msra.mxu0 %v1444
      %1473 = vmatprep.subr.bf16.mxu0 0
      %1474 = vmatpush1.bf16.msra.mxu0 %v1443
      %1475 = vmatprep.subr.bf16.mxu0 0
      %1476 = vmatpush2.bf16.msra.mxu0 0
      %1477 = vmatprep.subr.bf16.mxu0 0
      %1478 = vmatpush2.bf16.msra.mxu0 0
      %1479 = vmatprep.subr.bf16.mxu0 0
      %1480 = vmatpush2.bf16.msra.mxu0 0
      %1481 = vmatprep.subr.bf16.mxu0 0
      %1482 = vmatpush2.bf16.msra.mxu0 0
      %1483 = vmatprep.subr.bf16.mxu0 0
      %1484 = vmatpush2.bf16.msra.mxu0 0
      %1485 = vmatprep.subr.bf16.mxu0 0
      %1486 = vmatpush2.bf16.msra.mxu0 0
      %1487 = vmatprep.subr.bf16.mxu0 0
      %1488 = vmatpush2.bf16.msra.mxu0 0
      %1489 = vmatprep.subr.bf16.mxu0 0
      %1490 = vmatpush2.bf16.msra.mxu0 0
      %1491 = vmatprep.mubr.bf16.mxu0 0
      %1492 = vmatmul.mubr.bf16.gmra.mxu0 %v1394
      %v1493 = vpop.f32.mrf.mxu0
      %v1494 = vadd.f32 0.0, %v1493
      %v1495 = vpop.f32.mrf.mxu0
      %v1496 = vpop.f32.mrf.mxu0
      %v1497 = vpop.f32.mrf.mxu0
      %1498 = vdwg.mxu0
      %v1499 = vld [vmem:[%s12] sm:$0x1]
      %v1500 = vld [vmem:[%s13] sm:$0x1]
      %v1501 = vsel %vm1086, %v1494, 0.0
      %v1502 = vrot.slane %v1501, 4
      %v1503 = vadd.f32 %v1501, %v1502
      %v1504 = vrot.slane %v1503, 2
      %v1505 = vadd.f32 %v1503, %v1504
      %v1506 = vrot.slane %v1505, 1
      %v1507 = vadd.f32 %v1505, %v1506
      %v1508 = vmul.f32 %v1507, %v1094
      %v1509 = vsub.f32 %v1494, %v1508
      %v1510 = vmul.f32 %v1509, %v1509
      %v1511 = vsel %vm1086, %v1510, 0.0
      %v1512 = vrot.slane %v1511, 4
      %v1513 = vadd.f32 %v1511, %v1512
      %v1514 = vrot.slane %v1513, 2
      %v1515 = vadd.f32 %v1513, %v1514
      %v1516 = vrot.slane %v1515, 1
      %v1517 = vadd.f32 %v1515, %v1516
      %v1518 = vmul.f32 %v1517, %v1094
      %v1519 = vadd.f32 %v1518, 1e-05
      %v1520 = vrsqrt.pop %v1519
      %v1521 = vmul.f32 %v1509, %v1520
      %v1523 = vlaneseq
      %v1524 = vshrl.u32 %v1523, 7
      %v1525 = vsub.s32 0, %v1524
      %v1526 = vrot.slane %v1499, %v1525
      %v1528 = vmul.f32 %v1521, %v1526
      %v1530 = vlaneseq
      %v1531 = vshrl.u32 %v1530, 7
      %v1532 = vsub.s32 0, %v1531
      %v1533 = vrot.slane %v1500, %v1532
      %v1535 = vadd.f32 %v1528, %v1533
      %v1536 = vmax.f32 %v1535, 0.0
      %v1537 = vpack.c.bf16 %v1536, %v1536
      %v1538 = vld [vmem:[%s14] sm:$0xf]
      %v1539 = vld [vmem:[%s14 + $0x4] sm:$0xf]
      %v1540 = vld [vmem:[%s14 + $0x8] sm:$0xf]
      %v1541 = vld [vmem:[%s14 + $0xc] sm:$0xf]
      %v1542 = vld [vmem:[%s14 + $0x10] sm:$0xf]
      %v1543 = vld [vmem:[%s14 + $0x14] sm:$0xf]
      %v1544 = vld [vmem:[%s14 + $0x18] sm:$0xf]
      %v1545 = vld [vmem:[%s14 + $0x1c] sm:$0xf]
      %v1546 = vld [vmem:[%s14 + $0x20] sm:$0xf]
      %v1547 = vld [vmem:[%s14 + $0x24] sm:$0xf]
      %v1548 = vld [vmem:[%s14 + $0x28] sm:$0xf]
      %v1549 = vld [vmem:[%s14 + $0x2c] sm:$0xf]
      %v1550 = vld [vmem:[%s14 + $0x30] sm:$0xf]
      %v1551 = vld [vmem:[%s14 + $0x34] sm:$0xf]
      %v1552 = vld [vmem:[%s14 + $0x38] sm:$0xf]
      %v1553 = vld [vmem:[%s14 + $0x3c] sm:$0xf]
      %v1554 = vld [vmem:[%s15] sm:$0x1]
      %v1556 = vlaneseq
      %v1557 = vshrl.u32 %v1556, 7
      %v1558 = vsub.s32 0, %v1557
      %v1559 = vrot.slane %v1554, %v1558
      %v1577 = vunpack.c.l.b16 %v1538
      %v1578 = vunpack.c.l.b16 %v1539
      %v1579 = vunpack.c.l.b16 %v1540
      %v1580 = vunpack.c.l.b16 %v1541
      %v1581 = vunpack.c.l.b16 %v1542
      %v1582 = vunpack.c.l.b16 %v1543
      %v1583 = vunpack.c.l.b16 %v1544
      %v1584 = vunpack.c.l.b16 %v1545
      %v1585 = vunpack.c.l.b16 %v1546
      %v1586 = vunpack.c.l.b16 %v1547
      %v1587 = vunpack.c.l.b16 %v1548
      %v1588 = vunpack.c.l.b16 %v1549
      %v1589 = vunpack.c.l.b16 %v1550
      %v1590 = vunpack.c.l.b16 %v1551
      %v1591 = vunpack.c.l.b16 %v1552
      %v1592 = vunpack.c.l.b16 %v1553
      %v1593 = vpack.c.b16 %v1578, %v1577
      %v1594 = vpack.c.b16 %v1580, %v1579
      %v1595 = vpack.c.b16 %v1582, %v1581
      %v1596 = vpack.c.b16 %v1584, %v1583
      %v1597 = vpack.c.b16 %v1586, %v1585
      %v1598 = vpack.c.b16 %v1588, %v1587
      %v1599 = vpack.c.b16 %v1590, %v1589
      %v1600 = vpack.c.b16 %v1592, %v1591
      %1609 = vmatprep.subr.bf16.mxu0 0
      %1610 = vmatpush1.bf16.msra.mxu0 %v1600
      %1611 = vmatprep.subr.bf16.mxu0 0
      %1612 = vmatpush1.bf16.msra.mxu0 %v1599
      %1613 = vmatprep.subr.bf16.mxu0 0
      %1614 = vmatpush1.bf16.msra.mxu0 %v1598
      %1615 = vmatprep.subr.bf16.mxu0 0
      %1616 = vmatpush1.bf16.msra.mxu0 %v1597
      %1617 = vmatprep.subr.bf16.mxu0 0
      %1618 = vmatpush1.bf16.msra.mxu0 %v1596
      %1619 = vmatprep.subr.bf16.mxu0 0
      %1620 = vmatpush1.bf16.msra.mxu0 %v1595
      %1621 = vmatprep.subr.bf16.mxu0 0
      %1622 = vmatpush1.bf16.msra.mxu0 %v1594
      %1623 = vmatprep.subr.bf16.mxu0 0
      %1624 = vmatpush1.bf16.msra.mxu0 %v1593
      %1625 = vmatprep.subr.bf16.mxu0 0
      %1626 = vmatpush2.bf16.msra.mxu0 0
      %1627 = vmatprep.subr.bf16.mxu0 0
      %1628 = vmatpush2.bf16.msra.mxu0 0
      %1629 = vmatprep.subr.bf16.mxu0 0
      %1630 = vmatpush2.bf16.msra.mxu0 0
      %1631 = vmatprep.subr.bf16.mxu0 0
      %1632 = vmatpush2.bf16.msra.mxu0 0
      %1633 = vmatprep.subr.bf16.mxu0 0
      %1634 = vmatpush2.bf16.msra.mxu0 0
      %1635 = vmatprep.subr.bf16.mxu0 0
      %1636 = vmatpush2.bf16.msra.mxu0 0
      %1637 = vmatprep.subr.bf16.mxu0 0
      %1638 = vmatpush2.bf16.msra.mxu0 0
      %1639 = vmatprep.subr.bf16.mxu0 0
      %1640 = vmatpush2.bf16.msra.mxu0 0
      %1641 = vmatprep.mubr.bf16.mxu0 0
      %1642 = vmatmul.mubr.bf16.gmra.mxu0 %v1537
      %v1643 = vpop.f32.mrf.mxu0
      %v1644 = vadd.f32 %v1559, %v1643
      %v1645 = vpop.f32.mrf.mxu0
      %v1646 = vpop.f32.mrf.mxu0
      %v1647 = vpop.f32.mrf.mxu0
      %1648 = vdwg.mxu0
      %1649 = vst [vmem:[%s557] sm:$0x3] %v1644
      %p1650 = scmp.lt.s32.totalorder %s29, 1
      %s1651 = scalar_select %p1650, %s29, 1
      %s1652 = smul.addr %s1651, 2
      %s1653 = scalar_lea.vmem %s16, %s1652
      %p1654 = scmp.lt.s32.totalorder %s29, 1
      %s1655 = scalar_select %p1654, %s29, 1
      %s1656 = smul.addr %s1655, 2
      %s1657 = scalar_lea.vmem %s17, %s1656
      // Predicated region
      $region85: #{simsiam_forward.1} parent=83 // pred_check
        %p1658 = pneg %p388
      $region86: #{simsiam_forward.1} parent=83 // pred_check_branch
        %1660 = sbr.rel (%p1658) target = $region88
      $region87: #{simsiam_forward.1} parent=83 // pred_region
        _
      $region88: #{simsiam_forward.1} parent=83 // pred_fallthru
        _
      // Predicated region
      $region89: #{simsiam_forward.1} parent=83 // pred_check
        %p1661 = pneg %p414
      $region90: #{simsiam_forward.1} parent=83 // pred_check_branch
        %1663 = sbr.rel (%p1661) target = $region92
      $region91: #{simsiam_forward.1} parent=83 // pred_region
        _
      $region92: #{simsiam_forward.1} parent=83 // pred_fallthru
        _
    $region84: #{simsiam_forward.1} parent=5 // pred_fallthru
      _
    %p1664 = scmp.le.s32.totalorder 2, %s24
    // Predicated region
    $region93: #{simsiam_forward.1} parent=5 // pred_check
      %p1665 = pneg %p1664
    $region94: #{simsiam_forward.1} parent=5 // pred_check_branch
      %1667 = sbr.rel (%p1665) target = $region96
    $region95: #{simsiam_forward.1} parent=5 // pred_region
      %s1668 = ssub.s32 %s24, 2
      // Predicated region
      $region97: #{simsiam_forward.1} parent=95 // pred_check
        %p1669 = pneg %p394
      $region98: #{simsiam_forward.1} parent=95 // pred_check_branch
        %1671 = sbr.rel (%p1669) target = $region100
      $region99: #{simsiam_forward.1} parent=95 // pred_region
        %p1672 = scmp.lt.s32.totalorder %s30, 1
        %s1673 = scalar_select %p1672, %s30, 1
        %s1674 = smul.addr %s1673, 2
        %s1675 = scalar_lea.vmem %s16, %s1674
      $region100: #{simsiam_forward.1} parent=95 // pred_fallthru
        _
      // Predicated region
      $region101: #{simsiam_forward.1} parent=95 // pred_check
        %p1676 = pneg %p420
      $region102: #{simsiam_forward.1} parent=95 // pred_check_branch
        %1678 = sbr.rel (%p1676) target = $region104
      $region103: #{simsiam_forward.1} parent=95 // pred_region
        %p1679 = scmp.lt.s32.totalorder %s30, 1
        %s1680 = scalar_select %p1679, %s30, 1
        %s1681 = smul.addr %s1680, 2
        %s1682 = scalar_lea.vmem %s17, %s1681
      $region104: #{simsiam_forward.1} parent=95 // pred_fallthru
        _
    $region96: #{simsiam_forward.1} parent=5 // pred_fallthru
      _
  $region6: #{simsiam_forward.1} parent=0 // loop_footer
    %s28 = sadd.s32 1, %s24
  $region7: #{simsiam_forward.1} parent=0 // loop_footer_branch
    %23 = sbr.rel target = $region3
  $region8: #{simsiam_forward.1} parent=0 // loop_exit
    _

</llo_original>
